<compile_context>
chip_gen: v7x
topology: tpu7x:2x2x1
jax: 0.10.0
libtpu: 0.0.40
codegen_flags: <defaults>
</compile_context>

<pallas_src>
import numpy as np
import jax
import jax.numpy as jnp
from jax.experimental import pallas as pl
from jax.experimental.pallas import tpu as pltpu

HIDDEN = 32  # hidden_size of the LSTM; 4*HIDDEN == 128 == one vreg lane width


def lstm_fc_kernel(x_ref, wrow_ref, bias_ref, whh_ref, fcw_ref, fcb_ref,
                   out_ref):
    """x_ref: (T, B, 1); wrow/bias: (1, 4H); whh: (H, 4H); fcw: (H, 1)."""
    T, B, _ = x_ref.shape
    H = HIDDEN
    G = 4 * H                        # 128

    whh = whh_ref[...]               # (H, 4H) -- loaded once, stays resident
    wrow = wrow_ref[...]             # (1, 4H)
    bias = bias_ref[...]             # (1, 4H)  (b_ih + b_hh)

    # Lane-index masks, hoisted out of the recurrence (one vreg each).
    # Lanes [2H, 3H) hold the cell (g) gate -> plain tanh; all other gates are
    # sigmoids, computed from the same tanh via sigmoid(x) = 0.5*tanh(x/2)+0.5.
    lane = jax.lax.broadcasted_iota(jnp.int32, (B, G), 1)
    is_g = jnp.logical_and(lane >= 2 * H, lane < 3 * H)
    pre_scale = jnp.where(is_g, 1.0, 0.5).astype(jnp.float32)   # (B, G)
    post_off = jnp.where(is_g, 0.0, 0.5).astype(jnp.float32)    # (B, G)

    def step(t, carry):
        h, c = carry
        # Fused input projection (K=1 -> pure broadcast mul) + recurrent dot.
        gates = (x_ref[t] * wrow + bias
                 + jnp.dot(h, whh, preferred_element_type=jnp.float32))
        # Single EUP tanh pass over all 128 lanes.
        th = jnp.tanh(gates * pre_scale)
        act = th * pre_scale + post_off
        # PyTorch gate order: input, forget, cell (g), output.
        i = act[:, 0 * H:1 * H]
        f = act[:, 1 * H:2 * H]
        g = act[:, 2 * H:3 * H]
        o = act[:, 3 * H:4 * H]
        c_new = f * c + i * g
        h_new = o * jnp.tanh(c_new)
        return h_new, c_new

    # PyTorch default: zero-initialized (h0, c0).
    h0 = jnp.zeros((B, H), jnp.float32)
    c0 = jnp.zeros((B, H), jnp.float32)
    unroll = True if T <= 64 else 8   # cap unroll for long sequences
    h_last, _ = jax.lax.fori_loop(0, T, step, (h0, c0), unroll=unroll)

    # Fused fc = Linear(32, 1) on the last hidden state; runs once per call.
    out_ref[...] = (jnp.dot(h_last, fcw_ref[...],
                            preferred_element_type=jnp.float32)
                    + fcb_ref[0])


@jax.jit
def heart_rate_lstm(x, params):
    """x: (B, T, 1) float32 -> (B,) float32 (matches .squeeze() for B > 1)."""
    B, T, _ = x.shape

    # Time-major layout so the dynamic time index hits the leading (untiled)
    # axis; this relayout is T*B*4 bytes -- negligible.
    x_tb = jnp.transpose(x, (1, 0, 2)).astype(jnp.float32)        # (T, B, 1)

    wrow = params["w_ih"].T.astype(jnp.float32)                   # (1, 4H)
    bias = (params["b_ih"] + params["b_hh"]).reshape(1, -1).astype(jnp.float32)
    whh_t = params["w_hh"].T.astype(jnp.float32)                  # (H, 4H)
    fcw_t = params["fc_w"].T.astype(jnp.float32)                  # (H, 1)
    fcb = params["fc_b"].astype(jnp.float32)                      # (1,)

    vmem = pl.BlockSpec(memory_space=pltpu.MemorySpace.VMEM)
    smem = pl.BlockSpec(memory_space=pltpu.MemorySpace.SMEM)

    # Single grid-less invocation: all operands live whole in VMEM
    # (x: T*B*4 B, weights < 20 KiB, state = 2 vregs of carries).
    out = pl.pallas_call(
        lstm_fc_kernel,
        out_shape=jax.ShapeDtypeStruct((B, 1), jnp.float32),
        in_specs=[vmem, vmem, vmem, vmem, vmem, smem],
        out_specs=vmem,
    )(x_tb, wrow, bias, whh_t, fcw_t, fcb)

    return out[:, 0]   # .squeeze(): (B, 1) -> (B,)  (B=1 would give (1,))


def init_params(key):
    """Deterministic init matching PyTorch shapes: uniform(-1/sqrt(H), 1/sqrt(H))."""
    k = 1.0 / np.sqrt(HIDDEN)
    keys = jax.random.split(key, 6)
    u = lambda kk, shape: jax.random.uniform(kk, shape, jnp.float32, -k, k)
    return {
        "w_ih": u(keys[0], (4 * HIDDEN, 1)),       # LSTM weight_ih_l0
        "w_hh": u(keys[1], (4 * HIDDEN, HIDDEN)),  # LSTM weight_hh_l0
        "b_ih": u(keys[2], (4 * HIDDEN,)),         # LSTM bias_ih_l0
        "b_hh": u(keys[3], (4 * HIDDEN,)),         # LSTM bias_hh_l0
        "fc_w": u(keys[4], (1, HIDDEN)),           # Linear weight
        "fc_b": u(keys[5], (1,)),                  # Linear bias
    }


def reference_forward(x, params):
    """Pure-JAX reference of the PyTorch forward (correctness check)."""
    B, T, _ = x.shape
    H = HIDDEN
    w_ih, w_hh = params["w_ih"], params["w_hh"]
    b = params["b_ih"] + params["b_hh"]

    def step(carry, x_t):
        h, c = carry
        gates = x_t @ w_ih.T + h @ w_hh.T + b
        i = jax.nn.sigmoid(gates[:, 0 * H:1 * H])
        f = jax.nn.sigmoid(gates[:, 1 * H:2 * H])
        g = jnp.tanh(gates[:, 2 * H:3 * H])
        o = jax.nn.sigmoid(gates[:, 3 * H:4 * H])
        c = f * c + i * g
        h = o * jnp.tanh(c)
        return (h, c), None

    h0 = jnp.zeros((B, H), jnp.float32)
    c0 = jnp.zeros((B, H), jnp.float32)
    (h_last, _), _ = jax.lax.scan(step, (h0, c0), jnp.transpose(x, (1, 0, 2)))
    return (h_last @ params["fc_w"].T + params["fc_b"])[:, 0]


if __name__ == "__main__":
    key = jax.random.PRNGKey(0)
    k_x, k_p = jax.random.split(key)

    B, T = 8, 16
    x = jax.random.normal(k_x, (B, T, 1), jnp.float32)   # heart-rate sequences
    params = init_params(k_p)

    y = jax.block_until_ready(heart_rate_lstm(x, params))

    y_ref = reference_forward(x, params)
    # tanh-derived sigmoid differs from jax.nn.sigmoid by a few ULP per step.
    np.testing.assert_allclose(np.asarray(y), np.asarray(y_ref),
                               rtol=1e-4, atol=1e-5)

    print("KERNEL_OK")
</pallas_src>

<mosaic_0001>
module attributes {stable_mosaic.version = 11 : i64} {
  func.func @lstm_fc_kernel(%arg0: memref<16x8x1xf32, #tpu.memory_space<vmem>>, %arg1: memref<1x128xf32, #tpu.memory_space<vmem>>, %arg2: memref<1x128xf32, #tpu.memory_space<vmem>>, %arg3: memref<32x128xf32, #tpu.memory_space<vmem>>, %arg4: memref<32x1xf32, #tpu.memory_space<vmem>>, %arg5: memref<1xf32, #tpu.memory_space<smem>>, %arg6: memref<8x1xf32, #tpu.memory_space<vmem>>) attributes {dimension_semantics = [], scalar_prefetch = 0 : i64, scratch_operands = 0 : i64, tpu.core_type = #tpu.core_type<tc>} {
    %c0 = arith.constant 0 : index
    %c0_0 = arith.constant 0 : index
    %0 = vector.load %arg3[%c0, %c0_0] : memref<32x128xf32, #tpu.memory_space<vmem>>, vector<32x128xf32>
    %c0_1 = arith.constant 0 : index
    %c0_2 = arith.constant 0 : index
    %1 = vector.load %arg1[%c0_1, %c0_2] : memref<1x128xf32, #tpu.memory_space<vmem>>, vector<1x128xf32>
    %c0_3 = arith.constant 0 : index
    %c0_4 = arith.constant 0 : index
    %2 = vector.load %arg2[%c0_3, %c0_4] : memref<1x128xf32, #tpu.memory_space<vmem>>, vector<1x128xf32>
    %3 = tpu.iota {dimensions = array<i32: 1>} : vector<8x128xi32>
    %c64_i32 = arith.constant 64 : i32
    %4 = vector.broadcast %c64_i32 : i32 to vector<8x128xi32>
    %5 = arith.cmpi sge, %3, %4 : vector<8x128xi32>
    %c96_i32 = arith.constant 96 : i32
    %6 = vector.broadcast %c96_i32 : i32 to vector<8x128xi32>
    %7 = arith.cmpi slt, %3, %6 : vector<8x128xi32>
    %8 = arith.andi %5, %7 : vector<8x128xi1>
    %cst = arith.constant 1.000000e+00 : f32
    %cst_5 = arith.constant 5.000000e-01 : f32
    %9 = vector.broadcast %cst : f32 to vector<8x128xf32>
    %10 = vector.broadcast %cst_5 : f32 to vector<8x128xf32>
    %11 = arith.select %8, %9, %10 : vector<8x128xi1>, vector<8x128xf32>
    %cst_6 = arith.constant 0.000000e+00 : f32
    %cst_7 = arith.constant 5.000000e-01 : f32
    %12 = vector.broadcast %cst_6 : f32 to vector<8x128xf32>
    %13 = vector.broadcast %cst_7 : f32 to vector<8x128xf32>
    %14 = arith.select %8, %12, %13 : vector<8x128xi1>, vector<8x128xf32>
    %cst_8 = arith.constant 0.000000e+00 : f32
    %15 = vector.broadcast %cst_8 : f32 to vector<8x32xf32>
    %cst_9 = arith.constant 0.000000e+00 : f32
    %16 = vector.broadcast %cst_9 : f32 to vector<8x32xf32>
    %c0_i32 = arith.constant 0 : i32
    %17 = arith.index_cast %c0_i32 : i32 to index
    %c0_10 = arith.constant 0 : index
    %c0_11 = arith.constant 0 : index
    %18 = vector.load %arg0[%17, %c0_10, %c0_11] : memref<16x8x1xf32, #tpu.memory_space<vmem>>, vector<1x8x1xf32>
    %19 = vector.shape_cast %18 : vector<1x8x1xf32> to vector<8x1xf32>
    %20 = vector.broadcast %19 : vector<8x1xf32> to vector<8x128xf32>
    %21 = vector.broadcast %1 : vector<1x128xf32> to vector<8x128xf32>
    %22 = arith.mulf %20, %21 : vector<8x128xf32>
    %23 = vector.broadcast %2 : vector<1x128xf32> to vector<8x128xf32>
    %24 = arith.addf %22, %23 : vector<8x128xf32>
    %cst_12 = arith.constant dense<0.000000e+00> : vector<8x128xf32>
    %25 = tpu.matmul %15, %0, %cst_12 {dimension_numbers = #tpu.dot_dimension_numbers<[1], [0], [0], [1], [0, 0, 1, 1], [], []>} : vector<8x32xf32>, vector<32x128xf32>, vector<8x128xf32> -> vector<8x128xf32>
    %26 = arith.addf %24, %25 : vector<8x128xf32>
    %27 = arith.mulf %26, %11 : vector<8x128xf32>
    %28 = math.tanh %27 : vector<8x128xf32>
    %29 = arith.mulf %28, %11 : vector<8x128xf32>
    %30 = arith.addf %29, %14 : vector<8x128xf32>
    %31 = vector.extract_strided_slice %30 {offsets = [0, 0], sizes = [8, 32], strides = [1, 1]} : vector<8x128xf32> to vector<8x32xf32>
    %32 = vector.extract_strided_slice %30 {offsets = [0, 32], sizes = [8, 32], strides = [1, 1]} : vector<8x128xf32> to vector<8x32xf32>
    %33 = vector.extract_strided_slice %30 {offsets = [0, 64], sizes = [8, 32], strides = [1, 1]} : vector<8x128xf32> to vector<8x32xf32>
    %34 = vector.extract_strided_slice %30 {offsets = [0, 96], sizes = [8, 32], strides = [1, 1]} : vector<8x128xf32> to vector<8x32xf32>
    %35 = arith.mulf %32, %16 : vector<8x32xf32>
    %36 = arith.mulf %31, %33 : vector<8x32xf32>
    %37 = arith.addf %35, %36 : vector<8x32xf32>
    %38 = math.tanh %37 : vector<8x32xf32>
    %39 = arith.mulf %34, %38 : vector<8x32xf32>
    %c1_i32 = arith.constant 1 : i32
    %40 = arith.index_cast %c1_i32 : i32 to index
    %c0_13 = arith.constant 0 : index
    %c0_14 = arith.constant 0 : index
    %41 = vector.load %arg0[%40, %c0_13, %c0_14] : memref<16x8x1xf32, #tpu.memory_space<vmem>>, vector<1x8x1xf32>
    %42 = vector.shape_cast %41 : vector<1x8x1xf32> to vector<8x1xf32>
    %43 = vector.broadcast %42 : vector<8x1xf32> to vector<8x128xf32>
    %44 = vector.broadcast %1 : vector<1x128xf32> to vector<8x128xf32>
    %45 = arith.mulf %43, %44 : vector<8x128xf32>
    %46 = vector.broadcast %2 : vector<1x128xf32> to vector<8x128xf32>
    %47 = arith.addf %45, %46 : vector<8x128xf32>
    %cst_15 = arith.constant dense<0.000000e+00> : vector<8x128xf32>
    %48 = tpu.matmul %39, %0, %cst_15 {dimension_numbers = #tpu.dot_dimension_numbers<[1], [0], [0], [1], [0, 0, 1, 1], [], []>} : vector<8x32xf32>, vector<32x128xf32>, vector<8x128xf32> -> vector<8x128xf32>
    %49 = arith.addf %47, %48 : vector<8x128xf32>
    %50 = arith.mulf %49, %11 : vector<8x128xf32>
    %51 = math.tanh %50 : vector<8x128xf32>
    %52 = arith.mulf %51, %11 : vector<8x128xf32>
    %53 = arith.addf %52, %14 : vector<8x128xf32>
    %54 = vector.extract_strided_slice %53 {offsets = [0, 0], sizes = [8, 32], strides = [1, 1]} : vector<8x128xf32> to vector<8x32xf32>
    %55 = vector.extract_strided_slice %53 {offsets = [0, 32], sizes = [8, 32], strides = [1, 1]} : vector<8x128xf32> to vector<8x32xf32>
    %56 = vector.extract_strided_slice %53 {offsets = [0, 64], sizes = [8, 32], strides = [1, 1]} : vector<8x128xf32> to vector<8x32xf32>
    %57 = vector.extract_strided_slice %53 {offsets = [0, 96], sizes = [8, 32], strides = [1, 1]} : vector<8x128xf32> to vector<8x32xf32>
    %58 = arith.mulf %55, %37 : vector<8x32xf32>
    %59 = arith.mulf %54, %56 : vector<8x32xf32>
    %60 = arith.addf %58, %59 : vector<8x32xf32>
    %61 = math.tanh %60 : vector<8x32xf32>
    %62 = arith.mulf %57, %61 : vector<8x32xf32>
    %c2_i32 = arith.constant 2 : i32
    %63 = arith.index_cast %c2_i32 : i32 to index
    %c0_16 = arith.constant 0 : index
    %c0_17 = arith.constant 0 : index
    %64 = vector.load %arg0[%63, %c0_16, %c0_17] : memref<16x8x1xf32, #tpu.memory_space<vmem>>, vector<1x8x1xf32>
    %65 = vector.shape_cast %64 : vector<1x8x1xf32> to vector<8x1xf32>
    %66 = vector.broadcast %65 : vector<8x1xf32> to vector<8x128xf32>
    %67 = vector.broadcast %1 : vector<1x128xf32> to vector<8x128xf32>
    %68 = arith.mulf %66, %67 : vector<8x128xf32>
    %69 = vector.broadcast %2 : vector<1x128xf32> to vector<8x128xf32>
    %70 = arith.addf %68, %69 : vector<8x128xf32>
    %cst_18 = arith.constant dense<0.000000e+00> : vector<8x128xf32>
    %71 = tpu.matmul %62, %0, %cst_18 {dimension_numbers = #tpu.dot_dimension_numbers<[1], [0], [0], [1], [0, 0, 1, 1], [], []>} : vector<8x32xf32>, vector<32x128xf32>, vector<8x128xf32> -> vector<8x128xf32>
    %72 = arith.addf %70, %71 : vector<8x128xf32>
    %73 = arith.mulf %72, %11 : vector<8x128xf32>
    %74 = math.tanh %73 : vector<8x128xf32>
    %75 = arith.mulf %74, %11 : vector<8x128xf32>
    %76 = arith.addf %75, %14 : vector<8x128xf32>
    %77 = vector.extract_strided_slice %76 {offsets = [0, 0], sizes = [8, 32], strides = [1, 1]} : vector<8x128xf32> to vector<8x32xf32>
    %78 = vector.extract_strided_slice %76 {offsets = [0, 32], sizes = [8, 32], strides = [1, 1]} : vector<8x128xf32> to vector<8x32xf32>
    %79 = vector.extract_strided_slice %76 {offsets = [0, 64], sizes = [8, 32], strides = [1, 1]} : vector<8x128xf32> to vector<8x32xf32>
    %80 = vector.extract_strided_slice %76 {offsets = [0, 96], sizes = [8, 32], strides = [1, 1]} : vector<8x128xf32> to vector<8x32xf32>
    %81 = arith.mulf %78, %60 : vector<8x32xf32>
    %82 = arith.mulf %77, %79 : vector<8x32xf32>
    %83 = arith.addf %81, %82 : vector<8x32xf32>
    %84 = math.tanh %83 : vector<8x32xf32>
    %85 = arith.mulf %80, %84 : vector<8x32xf32>
    %c3_i32 = arith.constant 3 : i32
    %86 = arith.index_cast %c3_i32 : i32 to index
    %c0_19 = arith.constant 0 : index
    %c0_20 = arith.constant 0 : index
    %87 = vector.load %arg0[%86, %c0_19, %c0_20] : memref<16x8x1xf32, #tpu.memory_space<vmem>>, vector<1x8x1xf32>
    %88 = vector.shape_cast %87 : vector<1x8x1xf32> to vector<8x1xf32>
    %89 = vector.broadcast %88 : vector<8x1xf32> to vector<8x128xf32>
    %90 = vector.broadcast %1 : vector<1x128xf32> to vector<8x128xf32>
    %91 = arith.mulf %89, %90 : vector<8x128xf32>
    %92 = vector.broadcast %2 : vector<1x128xf32> to vector<8x128xf32>
    %93 = arith.addf %91, %92 : vector<8x128xf32>
    %cst_21 = arith.constant dense<0.000000e+00> : vector<8x128xf32>
    %94 = tpu.matmul %85, %0, %cst_21 {dimension_numbers = #tpu.dot_dimension_numbers<[1], [0], [0], [1], [0, 0, 1, 1], [], []>} : vector<8x32xf32>, vector<32x128xf32>, vector<8x128xf32> -> vector<8x128xf32>
    %95 = arith.addf %93, %94 : vector<8x128xf32>
    %96 = arith.mulf %95, %11 : vector<8x128xf32>
    %97 = math.tanh %96 : vector<8x128xf32>
    %98 = arith.mulf %97, %11 : vector<8x128xf32>
    %99 = arith.addf %98, %14 : vector<8x128xf32>
    %100 = vector.extract_strided_slice %99 {offsets = [0, 0], sizes = [8, 32], strides = [1, 1]} : vector<8x128xf32> to vector<8x32xf32>
    %101 = vector.extract_strided_slice %99 {offsets = [0, 32], sizes = [8, 32], strides = [1, 1]} : vector<8x128xf32> to vector<8x32xf32>
    %102 = vector.extract_strided_slice %99 {offsets = [0, 64], sizes = [8, 32], strides = [1, 1]} : vector<8x128xf32> to vector<8x32xf32>
    %103 = vector.extract_strided_slice %99 {offsets = [0, 96], sizes = [8, 32], strides = [1, 1]} : vector<8x128xf32> to vector<8x32xf32>
    %104 = arith.mulf %101, %83 : vector<8x32xf32>
    %105 = arith.mulf %100, %102 : vector<8x32xf32>
    %106 = arith.addf %104, %105 : vector<8x32xf32>
    %107 = math.tanh %106 : vector<8x32xf32>
    %108 = arith.mulf %103, %107 : vector<8x32xf32>
    %c4_i32 = arith.constant 4 : i32
    %109 = arith.index_cast %c4_i32 : i32 to index
    %c0_22 = arith.constant 0 : index
    %c0_23 = arith.constant 0 : index
    %110 = vector.load %arg0[%109, %c0_22, %c0_23] : memref<16x8x1xf32, #tpu.memory_space<vmem>>, vector<1x8x1xf32>
    %111 = vector.shape_cast %110 : vector<1x8x1xf32> to vector<8x1xf32>
    %112 = vector.broadcast %111 : vector<8x1xf32> to vector<8x128xf32>
    %113 = vector.broadcast %1 : vector<1x128xf32> to vector<8x128xf32>
    %114 = arith.mulf %112, %113 : vector<8x128xf32>
    %115 = vector.broadcast %2 : vector<1x128xf32> to vector<8x128xf32>
    %116 = arith.addf %114, %115 : vector<8x128xf32>
    %cst_24 = arith.constant dense<0.000000e+00> : vector<8x128xf32>
    %117 = tpu.matmul %108, %0, %cst_24 {dimension_numbers = #tpu.dot_dimension_numbers<[1], [0], [0], [1], [0, 0, 1, 1], [], []>} : vector<8x32xf32>, vector<32x128xf32>, vector<8x128xf32> -> vector<8x128xf32>
    %118 = arith.addf %116, %117 : vector<8x128xf32>
    %119 = arith.mulf %118, %11 : vector<8x128xf32>
    %120 = math.tanh %119 : vector<8x128xf32>
    %121 = arith.mulf %120, %11 : vector<8x128xf32>
    %122 = arith.addf %121, %14 : vector<8x128xf32>
    %123 = vector.extract_strided_slice %122 {offsets = [0, 0], sizes = [8, 32], strides = [1, 1]} : vector<8x128xf32> to vector<8x32xf32>
    %124 = vector.extract_strided_slice %122 {offsets = [0, 32], sizes = [8, 32], strides = [1, 1]} : vector<8x128xf32> to vector<8x32xf32>
    %125 = vector.extract_strided_slice %122 {offsets = [0, 64], sizes = [8, 32], strides = [1, 1]} : vector<8x128xf32> to vector<8x32xf32>
    %126 = vector.extract_strided_slice %122 {offsets = [0, 96], sizes = [8, 32], strides = [1, 1]} : vector<8x128xf32> to vector<8x32xf32>
    %127 = arith.mulf %124, %106 : vector<8x32xf32>
    %128 = arith.mulf %123, %125 : vector<8x32xf32>
    %129 = arith.addf %127, %128 : vector<8x32xf32>
    %130 = math.tanh %129 : vector<8x32xf32>
    %131 = arith.mulf %126, %130 : vector<8x32xf32>
    %c5_i32 = arith.constant 5 : i32
    %132 = arith.index_cast %c5_i32 : i32 to index
    %c0_25 = arith.constant 0 : index
    %c0_26 = arith.constant 0 : index
    %133 = vector.load %arg0[%132, %c0_25, %c0_26] : memref<16x8x1xf32, #tpu.memory_space<vmem>>, vector<1x8x1xf32>
    %134 = vector.shape_cast %133 : vector<1x8x1xf32> to vector<8x1xf32>
    %135 = vector.broadcast %134 : vector<8x1xf32> to vector<8x128xf32>
    %136 = vector.broadcast %1 : vector<1x128xf32> to vector<8x128xf32>
    %137 = arith.mulf %135, %136 : vector<8x128xf32>
    %138 = vector.broadcast %2 : vector<1x128xf32> to vector<8x128xf32>
    %139 = arith.addf %137, %138 : vector<8x128xf32>
    %cst_27 = arith.constant dense<0.000000e+00> : vector<8x128xf32>
    %140 = tpu.matmul %131, %0, %cst_27 {dimension_numbers = #tpu.dot_dimension_numbers<[1], [0], [0], [1], [0, 0, 1, 1], [], []>} : vector<8x32xf32>, vector<32x128xf32>, vector<8x128xf32> -> vector<8x128xf32>
    %141 = arith.addf %139, %140 : vector<8x128xf32>
    %142 = arith.mulf %141, %11 : vector<8x128xf32>
    %143 = math.tanh %142 : vector<8x128xf32>
    %144 = arith.mulf %143, %11 : vector<8x128xf32>
    %145 = arith.addf %144, %14 : vector<8x128xf32>
    %146 = vector.extract_strided_slice %145 {offsets = [0, 0], sizes = [8, 32], strides = [1, 1]} : vector<8x128xf32> to vector<8x32xf32>
    %147 = vector.extract_strided_slice %145 {offsets = [0, 32], sizes = [8, 32], strides = [1, 1]} : vector<8x128xf32> to vector<8x32xf32>
    %148 = vector.extract_strided_slice %145 {offsets = [0, 64], sizes = [8, 32], strides = [1, 1]} : vector<8x128xf32> to vector<8x32xf32>
    %149 = vector.extract_strided_slice %145 {offsets = [0, 96], sizes = [8, 32], strides = [1, 1]} : vector<8x128xf32> to vector<8x32xf32>
    %150 = arith.mulf %147, %129 : vector<8x32xf32>
    %151 = arith.mulf %146, %148 : vector<8x32xf32>
    %152 = arith.addf %150, %151 : vector<8x32xf32>
    %153 = math.tanh %152 : vector<8x32xf32>
    %154 = arith.mulf %149, %153 : vector<8x32xf32>
    %c6_i32 = arith.constant 6 : i32
    %155 = arith.index_cast %c6_i32 : i32 to index
    %c0_28 = arith.constant 0 : index
    %c0_29 = arith.constant 0 : index
    %156 = vector.load %arg0[%155, %c0_28, %c0_29] : memref<16x8x1xf32, #tpu.memory_space<vmem>>, vector<1x8x1xf32>
    %157 = vector.shape_cast %156 : vector<1x8x1xf32> to vector<8x1xf32>
    %158 = vector.broadcast %157 : vector<8x1xf32> to vector<8x128xf32>
    %159 = vector.broadcast %1 : vector<1x128xf32> to vector<8x128xf32>
    %160 = arith.mulf %158, %159 : vector<8x128xf32>
    %161 = vector.broadcast %2 : vector<1x128xf32> to vector<8x128xf32>
    %162 = arith.addf %160, %161 : vector<8x128xf32>
    %cst_30 = arith.constant dense<0.000000e+00> : vector<8x128xf32>
    %163 = tpu.matmul %154, %0, %cst_30 {dimension_numbers = #tpu.dot_dimension_numbers<[1], [0], [0], [1], [0, 0, 1, 1], [], []>} : vector<8x32xf32>, vector<32x128xf32>, vector<8x128xf32> -> vector<8x128xf32>
    %164 = arith.addf %162, %163 : vector<8x128xf32>
    %165 = arith.mulf %164, %11 : vector<8x128xf32>
    %166 = math.tanh %165 : vector<8x128xf32>
    %167 = arith.mulf %166, %11 : vector<8x128xf32>
    %168 = arith.addf %167, %14 : vector<8x128xf32>
    %169 = vector.extract_strided_slice %168 {offsets = [0, 0], sizes = [8, 32], strides = [1, 1]} : vector<8x128xf32> to vector<8x32xf32>
    %170 = vector.extract_strided_slice %168 {offsets = [0, 32], sizes = [8, 32], strides = [1, 1]} : vector<8x128xf32> to vector<8x32xf32>
    %171 = vector.extract_strided_slice %168 {offsets = [0, 64], sizes = [8, 32], strides = [1, 1]} : vector<8x128xf32> to vector<8x32xf32>
    %172 = vector.extract_strided_slice %168 {offsets = [0, 96], sizes = [8, 32], strides = [1, 1]} : vector<8x128xf32> to vector<8x32xf32>
    %173 = arith.mulf %170, %152 : vector<8x32xf32>
    %174 = arith.mulf %169, %171 : vector<8x32xf32>
    %175 = arith.addf %173, %174 : vector<8x32xf32>
    %176 = math.tanh %175 : vector<8x32xf32>
    %177 = arith.mulf %172, %176 : vector<8x32xf32>
    %c7_i32 = arith.constant 7 : i32
    %178 = arith.index_cast %c7_i32 : i32 to index
    %c0_31 = arith.constant 0 : index
    %c0_32 = arith.constant 0 : index
    %179 = vector.load %arg0[%178, %c0_31, %c0_32] : memref<16x8x1xf32, #tpu.memory_space<vmem>>, vector<1x8x1xf32>
    %180 = vector.shape_cast %179 : vector<1x8x1xf32> to vector<8x1xf32>
    %181 = vector.broadcast %180 : vector<8x1xf32> to vector<8x128xf32>
    %182 = vector.broadcast %1 : vector<1x128xf32> to vector<8x128xf32>
    %183 = arith.mulf %181, %182 : vector<8x128xf32>
    %184 = vector.broadcast %2 : vector<1x128xf32> to vector<8x128xf32>
    %185 = arith.addf %183, %184 : vector<8x128xf32>
    %cst_33 = arith.constant dense<0.000000e+00> : vector<8x128xf32>
    %186 = tpu.matmul %177, %0, %cst_33 {dimension_numbers = #tpu.dot_dimension_numbers<[1], [0], [0], [1], [0, 0, 1, 1], [], []>} : vector<8x32xf32>, vector<32x128xf32>, vector<8x128xf32> -> vector<8x128xf32>
    %187 = arith.addf %185, %186 : vector<8x128xf32>
    %188 = arith.mulf %187, %11 : vector<8x128xf32>
    %189 = math.tanh %188 : vector<8x128xf32>
    %190 = arith.mulf %189, %11 : vector<8x128xf32>
    %191 = arith.addf %190, %14 : vector<8x128xf32>
    %192 = vector.extract_strided_slice %191 {offsets = [0, 0], sizes = [8, 32], strides = [1, 1]} : vector<8x128xf32> to vector<8x32xf32>
    %193 = vector.extract_strided_slice %191 {offsets = [0, 32], sizes = [8, 32], strides = [1, 1]} : vector<8x128xf32> to vector<8x32xf32>
    %194 = vector.extract_strided_slice %191 {offsets = [0, 64], sizes = [8, 32], strides = [1, 1]} : vector<8x128xf32> to vector<8x32xf32>
    %195 = vector.extract_strided_slice %191 {offsets = [0, 96], sizes = [8, 32], strides = [1, 1]} : vector<8x128xf32> to vector<8x32xf32>
    %196 = arith.mulf %193, %175 : vector<8x32xf32>
    %197 = arith.mulf %192, %194 : vector<8x32xf32>
    %198 = arith.addf %196, %197 : vector<8x32xf32>
    %199 = math.tanh %198 : vector<8x32xf32>
    %200 = arith.mulf %195, %199 : vector<8x32xf32>
    %c8_i32 = arith.constant 8 : i32
    %201 = arith.index_cast %c8_i32 : i32 to index
    %c0_34 = arith.constant 0 : index
    %c0_35 = arith.constant 0 : index
    %202 = vector.load %arg0[%201, %c0_34, %c0_35] : memref<16x8x1xf32, #tpu.memory_space<vmem>>, vector<1x8x1xf32>
    %203 = vector.shape_cast %202 : vector<1x8x1xf32> to vector<8x1xf32>
    %204 = vector.broadcast %203 : vector<8x1xf32> to vector<8x128xf32>
    %205 = vector.broadcast %1 : vector<1x128xf32> to vector<8x128xf32>
    %206 = arith.mulf %204, %205 : vector<8x128xf32>
    %207 = vector.broadcast %2 : vector<1x128xf32> to vector<8x128xf32>
    %208 = arith.addf %206, %207 : vector<8x128xf32>
    %cst_36 = arith.constant dense<0.000000e+00> : vector<8x128xf32>
    %209 = tpu.matmul %200, %0, %cst_36 {dimension_numbers = #tpu.dot_dimension_numbers<[1], [0], [0], [1], [0, 0, 1, 1], [], []>} : vector<8x32xf32>, vector<32x128xf32>, vector<8x128xf32> -> vector<8x128xf32>
    %210 = arith.addf %208, %209 : vector<8x128xf32>
    %211 = arith.mulf %210, %11 : vector<8x128xf32>
    %212 = math.tanh %211 : vector<8x128xf32>
    %213 = arith.mulf %212, %11 : vector<8x128xf32>
    %214 = arith.addf %213, %14 : vector<8x128xf32>
    %215 = vector.extract_strided_slice %214 {offsets = [0, 0], sizes = [8, 32], strides = [1, 1]} : vector<8x128xf32> to vector<8x32xf32>
    %216 = vector.extract_strided_slice %214 {offsets = [0, 32], sizes = [8, 32], strides = [1, 1]} : vector<8x128xf32> to vector<8x32xf32>
    %217 = vector.extract_strided_slice %214 {offsets = [0, 64], sizes = [8, 32], strides = [1, 1]} : vector<8x128xf32> to vector<8x32xf32>
    %218 = vector.extract_strided_slice %214 {offsets = [0, 96], sizes = [8, 32], strides = [1, 1]} : vector<8x128xf32> to vector<8x32xf32>
    %219 = arith.mulf %216, %198 : vector<8x32xf32>
    %220 = arith.mulf %215, %217 : vector<8x32xf32>
    %221 = arith.addf %219, %220 : vector<8x32xf32>
    %222 = math.tanh %221 : vector<8x32xf32>
    %223 = arith.mulf %218, %222 : vector<8x32xf32>
    %c9_i32 = arith.constant 9 : i32
    %224 = arith.index_cast %c9_i32 : i32 to index
    %c0_37 = arith.constant 0 : index
    %c0_38 = arith.constant 0 : index
    %225 = vector.load %arg0[%224, %c0_37, %c0_38] : memref<16x8x1xf32, #tpu.memory_space<vmem>>, vector<1x8x1xf32>
    %226 = vector.shape_cast %225 : vector<1x8x1xf32> to vector<8x1xf32>
    %227 = vector.broadcast %226 : vector<8x1xf32> to vector<8x128xf32>
    %228 = vector.broadcast %1 : vector<1x128xf32> to vector<8x128xf32>
    %229 = arith.mulf %227, %228 : vector<8x128xf32>
    %230 = vector.broadcast %2 : vector<1x128xf32> to vector<8x128xf32>
    %231 = arith.addf %229, %230 : vector<8x128xf32>
    %cst_39 = arith.constant dense<0.000000e+00> : vector<8x128xf32>
    %232 = tpu.matmul %223, %0, %cst_39 {dimension_numbers = #tpu.dot_dimension_numbers<[1], [0], [0], [1], [0, 0, 1, 1], [], []>} : vector<8x32xf32>, vector<32x128xf32>, vector<8x128xf32> -> vector<8x128xf32>
    %233 = arith.addf %231, %232 : vector<8x128xf32>
    %234 = arith.mulf %233, %11 : vector<8x128xf32>
    %235 = math.tanh %234 : vector<8x128xf32>
    %236 = arith.mulf %235, %11 : vector<8x128xf32>
    %237 = arith.addf %236, %14 : vector<8x128xf32>
    %238 = vector.extract_strided_slice %237 {offsets = [0, 0], sizes = [8, 32], strides = [1, 1]} : vector<8x128xf32> to vector<8x32xf32>
    %239 = vector.extract_strided_slice %237 {offsets = [0, 32], sizes = [8, 32], strides = [1, 1]} : vector<8x128xf32> to vector<8x32xf32>
    %240 = vector.extract_strided_slice %237 {offsets = [0, 64], sizes = [8, 32], strides = [1, 1]} : vector<8x128xf32> to vector<8x32xf32>
    %241 = vector.extract_strided_slice %237 {offsets = [0, 96], sizes = [8, 32], strides = [1, 1]} : vector<8x128xf32> to vector<8x32xf32>
    %242 = arith.mulf %239, %221 : vector<8x32xf32>
    %243 = arith.mulf %238, %240 : vector<8x32xf32>
    %244 = arith.addf %242, %243 : vector<8x32xf32>
    %245 = math.tanh %244 : vector<8x32xf32>
    %246 = arith.mulf %241, %245 : vector<8x32xf32>
    %c10_i32 = arith.constant 10 : i32
    %247 = arith.index_cast %c10_i32 : i32 to index
    %c0_40 = arith.constant 0 : index
    %c0_41 = arith.constant 0 : index
    %248 = vector.load %arg0[%247, %c0_40, %c0_41] : memref<16x8x1xf32, #tpu.memory_space<vmem>>, vector<1x8x1xf32>
    %249 = vector.shape_cast %248 : vector<1x8x1xf32> to vector<8x1xf32>
    %250 = vector.broadcast %249 : vector<8x1xf32> to vector<8x128xf32>
    %251 = vector.broadcast %1 : vector<1x128xf32> to vector<8x128xf32>
    %252 = arith.mulf %250, %251 : vector<8x128xf32>
    %253 = vector.broadcast %2 : vector<1x128xf32> to vector<8x128xf32>
    %254 = arith.addf %252, %253 : vector<8x128xf32>
    %cst_42 = arith.constant dense<0.000000e+00> : vector<8x128xf32>
    %255 = tpu.matmul %246, %0, %cst_42 {dimension_numbers = #tpu.dot_dimension_numbers<[1], [0], [0], [1], [0, 0, 1, 1], [], []>} : vector<8x32xf32>, vector<32x128xf32>, vector<8x128xf32> -> vector<8x128xf32>
    %256 = arith.addf %254, %255 : vector<8x128xf32>
    %257 = arith.mulf %256, %11 : vector<8x128xf32>
    %258 = math.tanh %257 : vector<8x128xf32>
    %259 = arith.mulf %258, %11 : vector<8x128xf32>
    %260 = arith.addf %259, %14 : vector<8x128xf32>
    %261 = vector.extract_strided_slice %260 {offsets = [0, 0], sizes = [8, 32], strides = [1, 1]} : vector<8x128xf32> to vector<8x32xf32>
    %262 = vector.extract_strided_slice %260 {offsets = [0, 32], sizes = [8, 32], strides = [1, 1]} : vector<8x128xf32> to vector<8x32xf32>
    %263 = vector.extract_strided_slice %260 {offsets = [0, 64], sizes = [8, 32], strides = [1, 1]} : vector<8x128xf32> to vector<8x32xf32>
    %264 = vector.extract_strided_slice %260 {offsets = [0, 96], sizes = [8, 32], strides = [1, 1]} : vector<8x128xf32> to vector<8x32xf32>
    %265 = arith.mulf %262, %244 : vector<8x32xf32>
    %266 = arith.mulf %261, %263 : vector<8x32xf32>
    %267 = arith.addf %265, %266 : vector<8x32xf32>
    %268 = math.tanh %267 : vector<8x32xf32>
    %269 = arith.mulf %264, %268 : vector<8x32xf32>
    %c11_i32 = arith.constant 11 : i32
    %270 = arith.index_cast %c11_i32 : i32 to index
    %c0_43 = arith.constant 0 : index
    %c0_44 = arith.constant 0 : index
    %271 = vector.load %arg0[%270, %c0_43, %c0_44] : memref<16x8x1xf32, #tpu.memory_space<vmem>>, vector<1x8x1xf32>
    %272 = vector.shape_cast %271 : vector<1x8x1xf32> to vector<8x1xf32>
    %273 = vector.broadcast %272 : vector<8x1xf32> to vector<8x128xf32>
    %274 = vector.broadcast %1 : vector<1x128xf32> to vector<8x128xf32>
    %275 = arith.mulf %273, %274 : vector<8x128xf32>
    %276 = vector.broadcast %2 : vector<1x128xf32> to vector<8x128xf32>
    %277 = arith.addf %275, %276 : vector<8x128xf32>
    %cst_45 = arith.constant dense<0.000000e+00> : vector<8x128xf32>
    %278 = tpu.matmul %269, %0, %cst_45 {dimension_numbers = #tpu.dot_dimension_numbers<[1], [0], [0], [1], [0, 0, 1, 1], [], []>} : vector<8x32xf32>, vector<32x128xf32>, vector<8x128xf32> -> vector<8x128xf32>
    %279 = arith.addf %277, %278 : vector<8x128xf32>
    %280 = arith.mulf %279, %11 : vector<8x128xf32>
    %281 = math.tanh %280 : vector<8x128xf32>
    %282 = arith.mulf %281, %11 : vector<8x128xf32>
    %283 = arith.addf %282, %14 : vector<8x128xf32>
    %284 = vector.extract_strided_slice %283 {offsets = [0, 0], sizes = [8, 32], strides = [1, 1]} : vector<8x128xf32> to vector<8x32xf32>
    %285 = vector.extract_strided_slice %283 {offsets = [0, 32], sizes = [8, 32], strides = [1, 1]} : vector<8x128xf32> to vector<8x32xf32>
    %286 = vector.extract_strided_slice %283 {offsets = [0, 64], sizes = [8, 32], strides = [1, 1]} : vector<8x128xf32> to vector<8x32xf32>
    %287 = vector.extract_strided_slice %283 {offsets = [0, 96], sizes = [8, 32], strides = [1, 1]} : vector<8x128xf32> to vector<8x32xf32>
    %288 = arith.mulf %285, %267 : vector<8x32xf32>
    %289 = arith.mulf %284, %286 : vector<8x32xf32>
    %290 = arith.addf %288, %289 : vector<8x32xf32>
    %291 = math.tanh %290 : vector<8x32xf32>
    %292 = arith.mulf %287, %291 : vector<8x32xf32>
    %c12_i32 = arith.constant 12 : i32
    %293 = arith.index_cast %c12_i32 : i32 to index
    %c0_46 = arith.constant 0 : index
    %c0_47 = arith.constant 0 : index
    %294 = vector.load %arg0[%293, %c0_46, %c0_47] : memref<16x8x1xf32, #tpu.memory_space<vmem>>, vector<1x8x1xf32>
    %295 = vector.shape_cast %294 : vector<1x8x1xf32> to vector<8x1xf32>
    %296 = vector.broadcast %295 : vector<8x1xf32> to vector<8x128xf32>
    %297 = vector.broadcast %1 : vector<1x128xf32> to vector<8x128xf32>
    %298 = arith.mulf %296, %297 : vector<8x128xf32>
    %299 = vector.broadcast %2 : vector<1x128xf32> to vector<8x128xf32>
    %300 = arith.addf %298, %299 : vector<8x128xf32>
    %cst_48 = arith.constant dense<0.000000e+00> : vector<8x128xf32>
    %301 = tpu.matmul %292, %0, %cst_48 {dimension_numbers = #tpu.dot_dimension_numbers<[1], [0], [0], [1], [0, 0, 1, 1], [], []>} : vector<8x32xf32>, vector<32x128xf32>, vector<8x128xf32> -> vector<8x128xf32>
    %302 = arith.addf %300, %301 : vector<8x128xf32>
    %303 = arith.mulf %302, %11 : vector<8x128xf32>
    %304 = math.tanh %303 : vector<8x128xf32>
    %305 = arith.mulf %304, %11 : vector<8x128xf32>
    %306 = arith.addf %305, %14 : vector<8x128xf32>
    %307 = vector.extract_strided_slice %306 {offsets = [0, 0], sizes = [8, 32], strides = [1, 1]} : vector<8x128xf32> to vector<8x32xf32>
    %308 = vector.extract_strided_slice %306 {offsets = [0, 32], sizes = [8, 32], strides = [1, 1]} : vector<8x128xf32> to vector<8x32xf32>
    %309 = vector.extract_strided_slice %306 {offsets = [0, 64], sizes = [8, 32], strides = [1, 1]} : vector<8x128xf32> to vector<8x32xf32>
    %310 = vector.extract_strided_slice %306 {offsets = [0, 96], sizes = [8, 32], strides = [1, 1]} : vector<8x128xf32> to vector<8x32xf32>
    %311 = arith.mulf %308, %290 : vector<8x32xf32>
    %312 = arith.mulf %307, %309 : vector<8x32xf32>
    %313 = arith.addf %311, %312 : vector<8x32xf32>
    %314 = math.tanh %313 : vector<8x32xf32>
    %315 = arith.mulf %310, %314 : vector<8x32xf32>
    %c13_i32 = arith.constant 13 : i32
    %316 = arith.index_cast %c13_i32 : i32 to index
    %c0_49 = arith.constant 0 : index
    %c0_50 = arith.constant 0 : index
    %317 = vector.load %arg0[%316, %c0_49, %c0_50] : memref<16x8x1xf32, #tpu.memory_space<vmem>>, vector<1x8x1xf32>
    %318 = vector.shape_cast %317 : vector<1x8x1xf32> to vector<8x1xf32>
    %319 = vector.broadcast %318 : vector<8x1xf32> to vector<8x128xf32>
    %320 = vector.broadcast %1 : vector<1x128xf32> to vector<8x128xf32>
    %321 = arith.mulf %319, %320 : vector<8x128xf32>
    %322 = vector.broadcast %2 : vector<1x128xf32> to vector<8x128xf32>
    %323 = arith.addf %321, %322 : vector<8x128xf32>
    %cst_51 = arith.constant dense<0.000000e+00> : vector<8x128xf32>
    %324 = tpu.matmul %315, %0, %cst_51 {dimension_numbers = #tpu.dot_dimension_numbers<[1], [0], [0], [1], [0, 0, 1, 1], [], []>} : vector<8x32xf32>, vector<32x128xf32>, vector<8x128xf32> -> vector<8x128xf32>
    %325 = arith.addf %323, %324 : vector<8x128xf32>
    %326 = arith.mulf %325, %11 : vector<8x128xf32>
    %327 = math.tanh %326 : vector<8x128xf32>
    %328 = arith.mulf %327, %11 : vector<8x128xf32>
    %329 = arith.addf %328, %14 : vector<8x128xf32>
    %330 = vector.extract_strided_slice %329 {offsets = [0, 0], sizes = [8, 32], strides = [1, 1]} : vector<8x128xf32> to vector<8x32xf32>
    %331 = vector.extract_strided_slice %329 {offsets = [0, 32], sizes = [8, 32], strides = [1, 1]} : vector<8x128xf32> to vector<8x32xf32>
    %332 = vector.extract_strided_slice %329 {offsets = [0, 64], sizes = [8, 32], strides = [1, 1]} : vector<8x128xf32> to vector<8x32xf32>
    %333 = vector.extract_strided_slice %329 {offsets = [0, 96], sizes = [8, 32], strides = [1, 1]} : vector<8x128xf32> to vector<8x32xf32>
    %334 = arith.mulf %331, %313 : vector<8x32xf32>
    %335 = arith.mulf %330, %332 : vector<8x32xf32>
    %336 = arith.addf %334, %335 : vector<8x32xf32>
    %337 = math.tanh %336 : vector<8x32xf32>
    %338 = arith.mulf %333, %337 : vector<8x32xf32>
    %c14_i32 = arith.constant 14 : i32
    %339 = arith.index_cast %c14_i32 : i32 to index
    %c0_52 = arith.constant 0 : index
    %c0_53 = arith.constant 0 : index
    %340 = vector.load %arg0[%339, %c0_52, %c0_53] : memref<16x8x1xf32, #tpu.memory_space<vmem>>, vector<1x8x1xf32>
    %341 = vector.shape_cast %340 : vector<1x8x1xf32> to vector<8x1xf32>
    %342 = vector.broadcast %341 : vector<8x1xf32> to vector<8x128xf32>
    %343 = vector.broadcast %1 : vector<1x128xf32> to vector<8x128xf32>
    %344 = arith.mulf %342, %343 : vector<8x128xf32>
    %345 = vector.broadcast %2 : vector<1x128xf32> to vector<8x128xf32>
    %346 = arith.addf %344, %345 : vector<8x128xf32>
    %cst_54 = arith.constant dense<0.000000e+00> : vector<8x128xf32>
    %347 = tpu.matmul %338, %0, %cst_54 {dimension_numbers = #tpu.dot_dimension_numbers<[1], [0], [0], [1], [0, 0, 1, 1], [], []>} : vector<8x32xf32>, vector<32x128xf32>, vector<8x128xf32> -> vector<8x128xf32>
    %348 = arith.addf %346, %347 : vector<8x128xf32>
    %349 = arith.mulf %348, %11 : vector<8x128xf32>
    %350 = math.tanh %349 : vector<8x128xf32>
    %351 = arith.mulf %350, %11 : vector<8x128xf32>
    %352 = arith.addf %351, %14 : vector<8x128xf32>
    %353 = vector.extract_strided_slice %352 {offsets = [0, 0], sizes = [8, 32], strides = [1, 1]} : vector<8x128xf32> to vector<8x32xf32>
    %354 = vector.extract_strided_slice %352 {offsets = [0, 32], sizes = [8, 32], strides = [1, 1]} : vector<8x128xf32> to vector<8x32xf32>
    %355 = vector.extract_strided_slice %352 {offsets = [0, 64], sizes = [8, 32], strides = [1, 1]} : vector<8x128xf32> to vector<8x32xf32>
    %356 = vector.extract_strided_slice %352 {offsets = [0, 96], sizes = [8, 32], strides = [1, 1]} : vector<8x128xf32> to vector<8x32xf32>
    %357 = arith.mulf %354, %336 : vector<8x32xf32>
    %358 = arith.mulf %353, %355 : vector<8x32xf32>
    %359 = arith.addf %357, %358 : vector<8x32xf32>
    %360 = math.tanh %359 : vector<8x32xf32>
    %361 = arith.mulf %356, %360 : vector<8x32xf32>
    %c15_i32 = arith.constant 15 : i32
    %362 = arith.index_cast %c15_i32 : i32 to index
    %c0_55 = arith.constant 0 : index
    %c0_56 = arith.constant 0 : index
    %363 = vector.load %arg0[%362, %c0_55, %c0_56] : memref<16x8x1xf32, #tpu.memory_space<vmem>>, vector<1x8x1xf32>
    %364 = vector.shape_cast %363 : vector<1x8x1xf32> to vector<8x1xf32>
    %365 = vector.broadcast %364 : vector<8x1xf32> to vector<8x128xf32>
    %366 = vector.broadcast %1 : vector<1x128xf32> to vector<8x128xf32>
    %367 = arith.mulf %365, %366 : vector<8x128xf32>
    %368 = vector.broadcast %2 : vector<1x128xf32> to vector<8x128xf32>
    %369 = arith.addf %367, %368 : vector<8x128xf32>
    %cst_57 = arith.constant dense<0.000000e+00> : vector<8x128xf32>
    %370 = tpu.matmul %361, %0, %cst_57 {dimension_numbers = #tpu.dot_dimension_numbers<[1], [0], [0], [1], [0, 0, 1, 1], [], []>} : vector<8x32xf32>, vector<32x128xf32>, vector<8x128xf32> -> vector<8x128xf32>
    %371 = arith.addf %369, %370 : vector<8x128xf32>
    %372 = arith.mulf %371, %11 : vector<8x128xf32>
    %373 = math.tanh %372 : vector<8x128xf32>
    %374 = arith.mulf %373, %11 : vector<8x128xf32>
    %375 = arith.addf %374, %14 : vector<8x128xf32>
    %376 = vector.extract_strided_slice %375 {offsets = [0, 0], sizes = [8, 32], strides = [1, 1]} : vector<8x128xf32> to vector<8x32xf32>
    %377 = vector.extract_strided_slice %375 {offsets = [0, 32], sizes = [8, 32], strides = [1, 1]} : vector<8x128xf32> to vector<8x32xf32>
    %378 = vector.extract_strided_slice %375 {offsets = [0, 64], sizes = [8, 32], strides = [1, 1]} : vector<8x128xf32> to vector<8x32xf32>
    %379 = vector.extract_strided_slice %375 {offsets = [0, 96], sizes = [8, 32], strides = [1, 1]} : vector<8x128xf32> to vector<8x32xf32>
    %380 = arith.mulf %377, %359 : vector<8x32xf32>
    %381 = arith.mulf %376, %378 : vector<8x32xf32>
    %382 = arith.addf %380, %381 : vector<8x32xf32>
    %383 = math.tanh %382 : vector<8x32xf32>
    %384 = arith.mulf %379, %383 : vector<8x32xf32>
    %c16_i32 = arith.constant 16 : i32
    %c0_58 = arith.constant 0 : index
    %c0_59 = arith.constant 0 : index
    %385 = vector.load %arg4[%c0_58, %c0_59] : memref<32x1xf32, #tpu.memory_space<vmem>>, vector<32x1xf32>
    %cst_60 = arith.constant dense<0.000000e+00> : vector<8x1xf32>
    %386 = tpu.matmul %384, %385, %cst_60 {dimension_numbers = #tpu.dot_dimension_numbers<[1], [0], [0], [1], [0, 0, 1, 1], [], []>} : vector<8x32xf32>, vector<32x1xf32>, vector<8x1xf32> -> vector<8x1xf32>
    %c0_61 = arith.constant 0 : index
    %387 = memref.load %arg5[%c0_61] : memref<1xf32, #tpu.memory_space<smem>>
    %388 = vector.broadcast %387 : f32 to vector<8x1xf32>
    %389 = arith.addf %386, %388 : vector<8x1xf32>
    %c0_62 = arith.constant 0 : index
    %c0_63 = arith.constant 0 : index
    %390 = vector.load %arg6[%c0_62, %c0_63] : memref<8x1xf32, #tpu.memory_space<vmem>>, vector<8x1xf32>
    tpu.vector_store %arg6[%c0_62, %c0_63], %389 {strides = array<i32>} : memref<8x1xf32, #tpu.memory_space<vmem>>, vector<8x1xf32>,
    return
  }
}

</mosaic_0001>

<llo_original>
// kernel: heart_rate_lstm.1
$region0: #{heart_rate_lstm.1}
  #allocation0 [shape = 'u32[]', space=smem, size = 0x4, offset = 0x4, fixed_abs, tag = 'smem constant byte address 0x4 - core index']
  #allocation1 [shape = 'u32[144,128]{1,0:T(1,128)}', space=vmem, size = 0x12000, scoped, tag = 'internal scratch']
  #allocation2 [shape = 'f32[1]{0:T(128)S(6)}', space=smem, size = 0x200, scoped, tag = 'scoped memory for heart_rate_lstm.1']
  %s0 = inlined_call_operand.vmem [shape: f32[16,8,1], index: 0, kind: input, shape index: {}]
  %s1 = inlined_call_operand.vmem [shape: f32[1,128], index: 1, kind: input, shape index: {}]
  %s2 = inlined_call_operand.vmem [shape: f32[1,128], index: 2, kind: input, shape index: {}]
  %s3 = inlined_call_operand.vmem [shape: f32[32,128], index: 3, kind: input, shape index: {}]
  %s4 = inlined_call_operand.vmem [shape: f32[32,1], index: 4, kind: input, shape index: {}]
  %s5 = inlined_call_operand.<no memory space> [shape: f32[1], index: 5, kind: input, shape index: {}]
  %s6 = inlined_call_operand.vmem [shape: f32[8,1], index: 6, kind: output, shape index: {}]
  %s7 = sld [smem:[#allocation0]]
  $region34: #{heart_rate_lstm.1} parent=0
    _
  %s9 = ssub.s32 1, %s7
  %s10 = scalar_select 0, %s9, %s7
  %11 = sst [smem:[#allocation2]] %s5
  // Predicated region
  $region2: #{heart_rate_lstm.1} parent=0 // pred_check
    _
  $region3: #{heart_rate_lstm.1} parent=0 // pred_check_branch
    %13 = sbr.rel (0) target = $region5
  $region4: #{heart_rate_lstm.1} parent=0 // pred_region
    _
  $region5: #{heart_rate_lstm.1} parent=0 // pred_fallthru
    _
  // Predicated region
  $region6: #{heart_rate_lstm.1} parent=0 // pred_check
    _
  $region7: #{heart_rate_lstm.1} parent=0 // pred_check_branch
    %15 = sbr.rel (0) target = $region9
  $region8: #{heart_rate_lstm.1} parent=0 // pred_region
    _
  $region9: #{heart_rate_lstm.1} parent=0 // pred_fallthru
    _
  // Predicated region
  $region10: #{heart_rate_lstm.1} parent=0 // pred_check
    _
  $region11: #{heart_rate_lstm.1} parent=0 // pred_check_branch
    %17 = sbr.rel (0) target = $region13
  $region12: #{heart_rate_lstm.1} parent=0 // pred_region
    _
  $region13: #{heart_rate_lstm.1} parent=0 // pred_fallthru
    _
  // Predicated region
  $region14: #{heart_rate_lstm.1} parent=0 // pred_check
    _
  $region15: #{heart_rate_lstm.1} parent=0 // pred_check_branch
    %19 = sbr.rel (0) target = $region17
  $region16: #{heart_rate_lstm.1} parent=0 // pred_region
    _
  $region17: #{heart_rate_lstm.1} parent=0 // pred_fallthru
    _
  // Predicated region
  $region18: #{heart_rate_lstm.1} parent=0 // pred_check
    _
  $region19: #{heart_rate_lstm.1} parent=0 // pred_check_branch
    %21 = sbr.rel (0) target = $region21
  $region20: #{heart_rate_lstm.1} parent=0 // pred_region
    _
  $region21: #{heart_rate_lstm.1} parent=0 // pred_fallthru
    _
  // Predicated region
  $region22: #{heart_rate_lstm.1} parent=0 // pred_check
    _
  $region23: #{heart_rate_lstm.1} parent=0 // pred_check_branch
    %23 = sbr.rel (0) target = $region25
  $region24: #{heart_rate_lstm.1} parent=0 // pred_region
    _
  $region25: #{heart_rate_lstm.1} parent=0 // pred_fallthru
    _
  %v24 = vld [vmem:[%s3] sm:$0xff]
  %v25 = vld [vmem:[%s3 + $0x8] sm:$0xff]
  %v26 = vld [vmem:[%s3 + $0x10] sm:$0xff]
  %v27 = vld [vmem:[%s3 + $0x18] sm:$0xff]
  %v28 = vld [vmem:[%s1] sm:$0x1]
  %v29 = vld [vmem:[%s2] sm:$0x1]
  %v30 = vlaneseq
  %v31 = vand.u32 %v30, 127
  %vm32 = vcmp.ge.s32.totalorder %v31, 64
  %vm33 = vcmp.lt.s32.totalorder %v31, 96
  %vm34 = vmand %vm32, %vm33
  %v35 = vsel %vm34, 1.0, 0.5
  %v36 = vsel %vm34, 0.0, 0.5
  %v37 = vld [vmem:[%s0] sm:$0xff]
  %39 = vset.pattern.permute.xlu0 0
  %40 = vperm.xlu0 %39, %v37
  %v41 = vpop.permute.xlu0 %40
  %v44 = vlaneseq
  %v45 = vshrl.u32 %v44, 7
  %v46 = vsub.s32 0, %v45
  %v47 = vrot.slane %v28, %v46
  %v49 = vmul.f32 %v41, %v47
  %v51 = vlaneseq
  %v52 = vshrl.u32 %v51, 7
  %v53 = vsub.s32 0, %v52
  %v54 = vrot.slane %v29, %v53
  %v56 = vadd.f32 %v49, %v54
  %vm57 = vcmask 261120
  %v59 = vsel %vm57, 0.0, 0
  %61 = vmatprep.subr.mxu0 0.0
  %62 = vmatpush1.msra.mxu0 %v24
  %63 = vmatprep.subr.mxu0 0.0
  %64 = vmatpush1.msra.mxu0 %v25
  %65 = vmatprep.subr.mxu0 0.0
  %66 = vmatpush1.msra.mxu0 %v26
  %67 = vmatprep.subr.mxu0 0.0
  %68 = vmatpush1.msra.mxu0 %v27
  %69 = vmatprep.subr.mxu0 0.0
  %70 = vmatpush1.msra.mxu0 0.0
  %71 = vmatprep.subr.mxu0 0.0
  %72 = vmatpush1.msra.mxu0 0.0
  %73 = vmatprep.subr.mxu0 0.0
  %74 = vmatpush1.msra.mxu0 0.0
  %75 = vmatprep.subr.mxu0 0.0
  %76 = vmatpush1.msra.mxu0 0.0
  %77 = vmatprep.subr.mxu0 0.0
  %78 = vmatpush1.msra.mxu0 0.0
  %79 = vmatprep.subr.mxu0 0.0
  %80 = vmatpush1.msra.mxu0 0.0
  %81 = vmatprep.subr.mxu0 0.0
  %82 = vmatpush1.msra.mxu0 0.0
  %83 = vmatprep.subr.mxu0 0.0
  %84 = vmatpush1.msra.mxu0 0.0
  %85 = vmatprep.subr.mxu0 0.0
  %86 = vmatpush1.msra.mxu0 0.0
  %87 = vmatprep.subr.mxu0 0.0
  %88 = vmatpush1.msra.mxu0 0.0
  %89 = vmatprep.subr.mxu0 0.0
  %90 = vmatpush1.msra.mxu0 0.0
  %91 = vmatprep.subr.mxu0 0.0
  %92 = vmatpush1.msra.mxu0 0.0
  %93 = vmatprep.subr.mxu0 0.0
  %94 = vmatpush1.msra.mxu0 0.0
  %95 = vmatprep.subr.mxu0 0.0
  %96 = vmatpush1.msra.mxu0 0.0
  %97 = vmatprep.subr.mxu0 0.0
  %98 = vmatpush1.msra.mxu0 0.0
  %99 = vmatprep.subr.mxu0 0.0
  %100 = vmatpush1.msra.mxu0 0.0
  %101 = vmatprep.subr.mxu0 0.0
  %102 = vmatpush1.msra.mxu0 0.0
  %103 = vmatprep.subr.mxu0 0.0
  %104 = vmatpush1.msra.mxu0 0.0
  %105 = vmatprep.subr.mxu0 0.0
  %106 = vmatpush1.msra.mxu0 0.0
  %107 = vmatprep.subr.mxu0 0.0
  %108 = vmatpush1.msra.mxu0 0.0
  %109 = vmatprep.subr.mxu0 0.0
  %110 = vmatpush1.msra.mxu0 0.0
  %111 = vmatprep.subr.mxu0 0.0
  %112 = vmatpush1.msra.mxu0 0.0
  %113 = vmatprep.subr.mxu0 0.0
  %114 = vmatpush1.msra.mxu0 0.0
  %115 = vmatprep.subr.mxu0 0.0
  %116 = vmatpush1.msra.mxu0 0.0
  %117 = vmatprep.subr.mxu0 0.0
  %118 = vmatpush1.msra.mxu0 0.0
  %119 = vmatprep.subr.mxu0 0.0
  %120 = vmatpush1.msra.mxu0 0.0
  %121 = vmatprep.subr.mxu0 0.0
  %122 = vmatpush1.msra.mxu0 0.0
  %123 = vmatprep.subr.mxu0 0.0
  %124 = vmatpush1.msra.mxu0 0.0
  %125 = vmatprep.mubr.f32.mxu0 0.0
  %126 = vmatmul.mubr.f32.gmra.mrb[0].mxu0 %v59
  %v127 = vpop.f32.mrb[0].mxu0
  %v128 = vadd.f32 0.0, %v127
  %v129 = vpop.f32.mrb[0].mxu0
  %130 = vdwg.mxu0
  %v131 = vadd.f32 %v56, %v128
  %v132 = vmul.f32 %v131, %v35
  %v133 = vtanh.pop %v132
  %v134 = vmul.f32 %v133, %v35
  %v135 = vadd.f32 %v134, %v36
  %v136 = vmul.f32 %v135, 0.0
  %138 = vrot.lane.b32.xlu0 %v135, 64
  %v139 = vpop.permute.xlu0 %138
  %v141 = vmul.f32 %v135, %v139
  %143 = vrot.lane.b32.xlu0 %v141, 32
  %v144 = vpop.permute.xlu0 %143
  %v146 = vadd.f32 %v136, %v144
  %v147 = vtanh.pop %v146
  %149 = vrot.lane.b32.xlu0 %v147, 64
  %v150 = vpop.permute.xlu0 %149
  %v152 = vmul.f32 %v135, %v150
  %s153 = scalar_lea.vmem %s0, 8
  %v154 = vld [vmem:[%s153] sm:$0xff]
  %156 = vset.pattern.permute.xlu0 0
  %157 = vperm.xlu0 %156, %v154
  %v158 = vpop.permute.xlu0 %157
  %v160 = vmul.f32 %v158, %v47
  %v161 = vadd.f32 %v160, %v54
  %163 = vrot.lane.b32.xlu0 %v152, 32
  %v164 = vpop.permute.xlu0 %163
  %v165 = vsel %vm57, %v164, 0
  %167 = vmatprep.subr.mxu0 0.0
  %168 = vmatpush1.msra.mxu0 %v24
  %169 = vmatprep.subr.mxu0 0.0
  %170 = vmatpush1.msra.mxu0 %v25
  %171 = vmatprep.subr.mxu0 0.0
  %172 = vmatpush1.msra.mxu0 %v26
  %173 = vmatprep.subr.mxu0 0.0
  %174 = vmatpush1.msra.mxu0 %v27
  %175 = vmatprep.subr.mxu0 0.0
  %176 = vmatpush1.msra.mxu0 0.0
  %177 = vmatprep.subr.mxu0 0.0
  %178 = vmatpush1.msra.mxu0 0.0
  %179 = vmatprep.subr.mxu0 0.0
  %180 = vmatpush1.msra.mxu0 0.0
  %181 = vmatprep.subr.mxu0 0.0
  %182 = vmatpush1.msra.mxu0 0.0
  %183 = vmatprep.subr.mxu0 0.0
  %184 = vmatpush1.msra.mxu0 0.0
  %185 = vmatprep.subr.mxu0 0.0
  %186 = vmatpush1.msra.mxu0 0.0
  %187 = vmatprep.subr.mxu0 0.0
  %188 = vmatpush1.msra.mxu0 0.0
  %189 = vmatprep.subr.mxu0 0.0
  %190 = vmatpush1.msra.mxu0 0.0
  %191 = vmatprep.subr.mxu0 0.0
  %192 = vmatpush1.msra.mxu0 0.0
  %193 = vmatprep.subr.mxu0 0.0
  %194 = vmatpush1.msra.mxu0 0.0
  %195 = vmatprep.subr.mxu0 0.0
  %196 = vmatpush1.msra.mxu0 0.0
  %197 = vmatprep.subr.mxu0 0.0
  %198 = vmatpush1.msra.mxu0 0.0
  %199 = vmatprep.subr.mxu0 0.0
  %200 = vmatpush1.msra.mxu0 0.0
  %201 = vmatprep.subr.mxu0 0.0
  %202 = vmatpush1.msra.mxu0 0.0
  %203 = vmatprep.subr.mxu0 0.0
  %204 = vmatpush1.msra.mxu0 0.0
  %205 = vmatprep.subr.mxu0 0.0
  %206 = vmatpush1.msra.mxu0 0.0
  %207 = vmatprep.subr.mxu0 0.0
  %208 = vmatpush1.msra.mxu0 0.0
  %209 = vmatprep.subr.mxu0 0.0
  %210 = vmatpush1.msra.mxu0 0.0
  %211 = vmatprep.subr.mxu0 0.0
  %212 = vmatpush1.msra.mxu0 0.0
  %213 = vmatprep.subr.mxu0 0.0
  %214 = vmatpush1.msra.mxu0 0.0
  %215 = vmatprep.subr.mxu0 0.0
  %216 = vmatpush1.msra.mxu0 0.0
  %217 = vmatprep.subr.mxu0 0.0
  %218 = vmatpush1.msra.mxu0 0.0
  %219 = vmatprep.subr.mxu0 0.0
  %220 = vmatpush1.msra.mxu0 0.0
  %221 = vmatprep.subr.mxu0 0.0
  %222 = vmatpush1.msra.mxu0 0.0
  %223 = vmatprep.subr.mxu0 0.0
  %224 = vmatpush1.msra.mxu0 0.0
  %225 = vmatprep.subr.mxu0 0.0
  %226 = vmatpush1.msra.mxu0 0.0
  %227 = vmatprep.subr.mxu0 0.0
  %228 = vmatpush1.msra.mxu0 0.0
  %229 = vmatprep.subr.mxu0 0.0
  %230 = vmatpush1.msra.mxu0 0.0
  %231 = vmatprep.mubr.f32.mxu0 0.0
  %232 = vmatmul.mubr.f32.gmra.mrb[0].mxu0 %v165
  %v233 = vpop.f32.mrb[0].mxu0
  %v234 = vadd.f32 0.0, %v233
  %v235 = vpop.f32.mrb[0].mxu0
  %236 = vdwg.mxu0
  %v237 = vadd.f32 %v161, %v234
  %v238 = vmul.f32 %v237, %v35
  %v239 = vtanh.pop %v238
  %v240 = vmul.f32 %v239, %v35
  %v241 = vadd.f32 %v240, %v36
  %v242 = vmul.f32 %v241, %v146
  %244 = vrot.lane.b32.xlu0 %v241, 64
  %v245 = vpop.permute.xlu0 %244
  %v247 = vmul.f32 %v241, %v245
  %249 = vrot.lane.b32.xlu0 %v247, 32
  %v250 = vpop.permute.xlu0 %249
  %v252 = vadd.f32 %v242, %v250
  %v253 = vtanh.pop %v252
  %255 = vrot.lane.b32.xlu0 %v253, 64
  %v256 = vpop.permute.xlu0 %255
  %v258 = vmul.f32 %v241, %v256
  %s259 = scalar_lea.vmem %s0, 16
  %v260 = vld [vmem:[%s259] sm:$0xff]
  %262 = vset.pattern.permute.xlu0 0
  %263 = vperm.xlu0 %262, %v260
  %v264 = vpop.permute.xlu0 %263
  %v266 = vmul.f32 %v264, %v47
  %v267 = vadd.f32 %v266, %v54
  %269 = vrot.lane.b32.xlu0 %v258, 32
  %v270 = vpop.permute.xlu0 %269
  %v271 = vsel %vm57, %v270, 0
  %273 = vmatprep.subr.mxu0 0.0
  %274 = vmatpush1.msra.mxu0 %v24
  %275 = vmatprep.subr.mxu0 0.0
  %276 = vmatpush1.msra.mxu0 %v25
  %277 = vmatprep.subr.mxu0 0.0
  %278 = vmatpush1.msra.mxu0 %v26
  %279 = vmatprep.subr.mxu0 0.0
  %280 = vmatpush1.msra.mxu0 %v27
  %281 = vmatprep.subr.mxu0 0.0
  %282 = vmatpush1.msra.mxu0 0.0
  %283 = vmatprep.subr.mxu0 0.0
  %284 = vmatpush1.msra.mxu0 0.0
  %285 = vmatprep.subr.mxu0 0.0
  %286 = vmatpush1.msra.mxu0 0.0
  %287 = vmatprep.subr.mxu0 0.0
  %288 = vmatpush1.msra.mxu0 0.0
  %289 = vmatprep.subr.mxu0 0.0
  %290 = vmatpush1.msra.mxu0 0.0
  %291 = vmatprep.subr.mxu0 0.0
  %292 = vmatpush1.msra.mxu0 0.0
  %293 = vmatprep.subr.mxu0 0.0
  %294 = vmatpush1.msra.mxu0 0.0
  %295 = vmatprep.subr.mxu0 0.0
  %296 = vmatpush1.msra.mxu0 0.0
  %297 = vmatprep.subr.mxu0 0.0
  %298 = vmatpush1.msra.mxu0 0.0
  %299 = vmatprep.subr.mxu0 0.0
  %300 = vmatpush1.msra.mxu0 0.0
  %301 = vmatprep.subr.mxu0 0.0
  %302 = vmatpush1.msra.mxu0 0.0
  %303 = vmatprep.subr.mxu0 0.0
  %304 = vmatpush1.msra.mxu0 0.0
  %305 = vmatprep.subr.mxu0 0.0
  %306 = vmatpush1.msra.mxu0 0.0
  %307 = vmatprep.subr.mxu0 0.0
  %308 = vmatpush1.msra.mxu0 0.0
  %309 = vmatprep.subr.mxu0 0.0
  %310 = vmatpush1.msra.mxu0 0.0
  %311 = vmatprep.subr.mxu0 0.0
  %312 = vmatpush1.msra.mxu0 0.0
  %313 = vmatprep.subr.mxu0 0.0
  %314 = vmatpush1.msra.mxu0 0.0
  %315 = vmatprep.subr.mxu0 0.0
  %316 = vmatpush1.msra.mxu0 0.0
  %317 = vmatprep.subr.mxu0 0.0
  %318 = vmatpush1.msra.mxu0 0.0
  %319 = vmatprep.subr.mxu0 0.0
  %320 = vmatpush1.msra.mxu0 0.0
  %321 = vmatprep.subr.mxu0 0.0
  %322 = vmatpush1.msra.mxu0 0.0
  %323 = vmatprep.subr.mxu0 0.0
  %324 = vmatpush1.msra.mxu0 0.0
  %325 = vmatprep.subr.mxu0 0.0
  %326 = vmatpush1.msra.mxu0 0.0
  %327 = vmatprep.subr.mxu0 0.0
  %328 = vmatpush1.msra.mxu0 0.0
  %329 = vmatprep.subr.mxu0 0.0
  %330 = vmatpush1.msra.mxu0 0.0
  %331 = vmatprep.subr.mxu0 0.0
  %332 = vmatpush1.msra.mxu0 0.0
  %333 = vmatprep.subr.mxu0 0.0
  %334 = vmatpush1.msra.mxu0 0.0
  %335 = vmatprep.subr.mxu0 0.0
  %336 = vmatpush1.msra.mxu0 0.0
  %337 = vmatprep.mubr.f32.mxu0 0.0
  %338 = vmatmul.mubr.f32.gmra.mrb[0].mxu0 %v271
  %v339 = vpop.f32.mrb[0].mxu0
  %v340 = vadd.f32 0.0, %v339
  %v341 = vpop.f32.mrb[0].mxu0
  %342 = vdwg.mxu0
  %v343 = vadd.f32 %v267, %v340
  %v344 = vmul.f32 %v343, %v35
  %v345 = vtanh.pop %v344
  %v346 = vmul.f32 %v345, %v35
  %v347 = vadd.f32 %v346, %v36
  %v348 = vmul.f32 %v347, %v252
  %350 = vrot.lane.b32.xlu0 %v347, 64
  %v351 = vpop.permute.xlu0 %350
  %v353 = vmul.f32 %v347, %v351
  %355 = vrot.lane.b32.xlu0 %v353, 32
  %v356 = vpop.permute.xlu0 %355
  %v358 = vadd.f32 %v348, %v356
  %v359 = vtanh.pop %v358
  %361 = vrot.lane.b32.xlu0 %v359, 64
  %v362 = vpop.permute.xlu0 %361
  %v364 = vmul.f32 %v347, %v362
  %s365 = scalar_lea.vmem %s0, 24
  %v366 = vld [vmem:[%s365] sm:$0xff]
  %368 = vset.pattern.permute.xlu0 0
  %369 = vperm.xlu0 %368, %v366
  %v370 = vpop.permute.xlu0 %369
  %v372 = vmul.f32 %v370, %v47
  %v373 = vadd.f32 %v372, %v54
  %375 = vrot.lane.b32.xlu0 %v364, 32
  %v376 = vpop.permute.xlu0 %375
  %v377 = vsel %vm57, %v376, 0
  %379 = vmatprep.subr.mxu0 0.0
  %380 = vmatpush1.msra.mxu0 %v24
  %381 = vmatprep.subr.mxu0 0.0
  %382 = vmatpush1.msra.mxu0 %v25
  %383 = vmatprep.subr.mxu0 0.0
  %384 = vmatpush1.msra.mxu0 %v26
  %385 = vmatprep.subr.mxu0 0.0
  %386 = vmatpush1.msra.mxu0 %v27
  %387 = vmatprep.subr.mxu0 0.0
  %388 = vmatpush1.msra.mxu0 0.0
  %389 = vmatprep.subr.mxu0 0.0
  %390 = vmatpush1.msra.mxu0 0.0
  %391 = vmatprep.subr.mxu0 0.0
  %392 = vmatpush1.msra.mxu0 0.0
  %393 = vmatprep.subr.mxu0 0.0
  %394 = vmatpush1.msra.mxu0 0.0
  %395 = vmatprep.subr.mxu0 0.0
  %396 = vmatpush1.msra.mxu0 0.0
  %397 = vmatprep.subr.mxu0 0.0
  %398 = vmatpush1.msra.mxu0 0.0
  %399 = vmatprep.subr.mxu0 0.0
  %400 = vmatpush1.msra.mxu0 0.0
  %401 = vmatprep.subr.mxu0 0.0
  %402 = vmatpush1.msra.mxu0 0.0
  %403 = vmatprep.subr.mxu0 0.0
  %404 = vmatpush1.msra.mxu0 0.0
  %405 = vmatprep.subr.mxu0 0.0
  %406 = vmatpush1.msra.mxu0 0.0
  %407 = vmatprep.subr.mxu0 0.0
  %408 = vmatpush1.msra.mxu0 0.0
  %409 = vmatprep.subr.mxu0 0.0
  %410 = vmatpush1.msra.mxu0 0.0
  %411 = vmatprep.subr.mxu0 0.0
  %412 = vmatpush1.msra.mxu0 0.0
  %413 = vmatprep.subr.mxu0 0.0
  %414 = vmatpush1.msra.mxu0 0.0
  %415 = vmatprep.subr.mxu0 0.0
  %416 = vmatpush1.msra.mxu0 0.0
  %417 = vmatprep.subr.mxu0 0.0
  %418 = vmatpush1.msra.mxu0 0.0
  %419 = vmatprep.subr.mxu0 0.0
  %420 = vmatpush1.msra.mxu0 0.0
  %421 = vmatprep.subr.mxu0 0.0
  %422 = vmatpush1.msra.mxu0 0.0
  %423 = vmatprep.subr.mxu0 0.0
  %424 = vmatpush1.msra.mxu0 0.0
  %425 = vmatprep.subr.mxu0 0.0
  %426 = vmatpush1.msra.mxu0 0.0
  %427 = vmatprep.subr.mxu0 0.0
  %428 = vmatpush1.msra.mxu0 0.0
  %429 = vmatprep.subr.mxu0 0.0
  %430 = vmatpush1.msra.mxu0 0.0
  %431 = vmatprep.subr.mxu0 0.0
  %432 = vmatpush1.msra.mxu0 0.0
  %433 = vmatprep.subr.mxu0 0.0
  %434 = vmatpush1.msra.mxu0 0.0
  %435 = vmatprep.subr.mxu0 0.0
  %436 = vmatpush1.msra.mxu0 0.0
  %437 = vmatprep.subr.mxu0 0.0
  %438 = vmatpush1.msra.mxu0 0.0
  %439 = vmatprep.subr.mxu0 0.0
  %440 = vmatpush1.msra.mxu0 0.0
  %441 = vmatprep.subr.mxu0 0.0
  %442 = vmatpush1.msra.mxu0 0.0
  %443 = vmatprep.mubr.f32.mxu0 0.0
  %444 = vmatmul.mubr.f32.gmra.mrb[0].mxu0 %v377
  %v445 = vpop.f32.mrb[0].mxu0
  %v446 = vadd.f32 0.0, %v445
  %v447 = vpop.f32.mrb[0].mxu0
  %448 = vdwg.mxu0
  %v449 = vadd.f32 %v373, %v446
  %v450 = vmul.f32 %v449, %v35
  %v451 = vtanh.pop %v450
  %v452 = vmul.f32 %v451, %v35
  %v453 = vadd.f32 %v452, %v36
  %v454 = vmul.f32 %v453, %v358
  %456 = vrot.lane.b32.xlu0 %v453, 64
  %v457 = vpop.permute.xlu0 %456
  %v459 = vmul.f32 %v453, %v457
  %461 = vrot.lane.b32.xlu0 %v459, 32
  %v462 = vpop.permute.xlu0 %461
  %v464 = vadd.f32 %v454, %v462
  %v465 = vtanh.pop %v464
  %467 = vrot.lane.b32.xlu0 %v465, 64
  %v468 = vpop.permute.xlu0 %467
  %v470 = vmul.f32 %v453, %v468
  %s471 = scalar_lea.vmem %s0, 32
  %v472 = vld [vmem:[%s471] sm:$0xff]
  %474 = vset.pattern.permute.xlu0 0
  %475 = vperm.xlu0 %474, %v472
  %v476 = vpop.permute.xlu0 %475
  %v478 = vmul.f32 %v476, %v47
  %v479 = vadd.f32 %v478, %v54
  %481 = vrot.lane.b32.xlu0 %v470, 32
  %v482 = vpop.permute.xlu0 %481
  %v483 = vsel %vm57, %v482, 0
  %485 = vmatprep.subr.mxu0 0.0
  %486 = vmatpush1.msra.mxu0 %v24
  %487 = vmatprep.subr.mxu0 0.0
  %488 = vmatpush1.msra.mxu0 %v25
  %489 = vmatprep.subr.mxu0 0.0
  %490 = vmatpush1.msra.mxu0 %v26
  %491 = vmatprep.subr.mxu0 0.0
  %492 = vmatpush1.msra.mxu0 %v27
  %493 = vmatprep.subr.mxu0 0.0
  %494 = vmatpush1.msra.mxu0 0.0
  %495 = vmatprep.subr.mxu0 0.0
  %496 = vmatpush1.msra.mxu0 0.0
  %497 = vmatprep.subr.mxu0 0.0
  %498 = vmatpush1.msra.mxu0 0.0
  %499 = vmatprep.subr.mxu0 0.0
  %500 = vmatpush1.msra.mxu0 0.0
  %501 = vmatprep.subr.mxu0 0.0
  %502 = vmatpush1.msra.mxu0 0.0
  %503 = vmatprep.subr.mxu0 0.0
  %504 = vmatpush1.msra.mxu0 0.0
  %505 = vmatprep.subr.mxu0 0.0
  %506 = vmatpush1.msra.mxu0 0.0
  %507 = vmatprep.subr.mxu0 0.0
  %508 = vmatpush1.msra.mxu0 0.0
  %509 = vmatprep.subr.mxu0 0.0
  %510 = vmatpush1.msra.mxu0 0.0
  %511 = vmatprep.subr.mxu0 0.0
  %512 = vmatpush1.msra.mxu0 0.0
  %513 = vmatprep.subr.mxu0 0.0
  %514 = vmatpush1.msra.mxu0 0.0
  %515 = vmatprep.subr.mxu0 0.0
  %516 = vmatpush1.msra.mxu0 0.0
  %517 = vmatprep.subr.mxu0 0.0
  %518 = vmatpush1.msra.mxu0 0.0
  %519 = vmatprep.subr.mxu0 0.0
  %520 = vmatpush1.msra.mxu0 0.0
  %521 = vmatprep.subr.mxu0 0.0
  %522 = vmatpush1.msra.mxu0 0.0
  %523 = vmatprep.subr.mxu0 0.0
  %524 = vmatpush1.msra.mxu0 0.0
  %525 = vmatprep.subr.mxu0 0.0
  %526 = vmatpush1.msra.mxu0 0.0
  %527 = vmatprep.subr.mxu0 0.0
  %528 = vmatpush1.msra.mxu0 0.0
  %529 = vmatprep.subr.mxu0 0.0
  %530 = vmatpush1.msra.mxu0 0.0
  %531 = vmatprep.subr.mxu0 0.0
  %532 = vmatpush1.msra.mxu0 0.0
  %533 = vmatprep.subr.mxu0 0.0
  %534 = vmatpush1.msra.mxu0 0.0
  %535 = vmatprep.subr.mxu0 0.0
  %536 = vmatpush1.msra.mxu0 0.0
  %537 = vmatprep.subr.mxu0 0.0
  %538 = vmatpush1.msra.mxu0 0.0
  %539 = vmatprep.subr.mxu0 0.0
  %540 = vmatpush1.msra.mxu0 0.0
  %541 = vmatprep.subr.mxu0 0.0
  %542 = vmatpush1.msra.mxu0 0.0
  %543 = vmatprep.subr.mxu0 0.0
  %544 = vmatpush1.msra.mxu0 0.0
  %545 = vmatprep.subr.mxu0 0.0
  %546 = vmatpush1.msra.mxu0 0.0
  %547 = vmatprep.subr.mxu0 0.0
  %548 = vmatpush1.msra.mxu0 0.0
  %549 = vmatprep.mubr.f32.mxu0 0.0
  %550 = vmatmul.mubr.f32.gmra.mrb[0].mxu0 %v483
  %v551 = vpop.f32.mrb[0].mxu0
  %v552 = vadd.f32 0.0, %v551
  %v553 = vpop.f32.mrb[0].mxu0
  %554 = vdwg.mxu0
  %v555 = vadd.f32 %v479, %v552
  %v556 = vmul.f32 %v555, %v35
  %v557 = vtanh.pop %v556
  %v558 = vmul.f32 %v557, %v35
  %v559 = vadd.f32 %v558, %v36
  %v560 = vmul.f32 %v559, %v464
  %562 = vrot.lane.b32.xlu0 %v559, 64
  %v563 = vpop.permute.xlu0 %562
  %v565 = vmul.f32 %v559, %v563
  %567 = vrot.lane.b32.xlu0 %v565, 32
  %v568 = vpop.permute.xlu0 %567
  %v570 = vadd.f32 %v560, %v568
  %v571 = vtanh.pop %v570
  %573 = vrot.lane.b32.xlu0 %v571, 64
  %v574 = vpop.permute.xlu0 %573
  %v576 = vmul.f32 %v559, %v574
  %s577 = scalar_lea.vmem %s0, 40
  %v578 = vld [vmem:[%s577] sm:$0xff]
  %580 = vset.pattern.permute.xlu0 0
  %581 = vperm.xlu0 %580, %v578
  %v582 = vpop.permute.xlu0 %581
  %v584 = vmul.f32 %v582, %v47
  %v585 = vadd.f32 %v584, %v54
  %587 = vrot.lane.b32.xlu0 %v576, 32
  %v588 = vpop.permute.xlu0 %587
  %v589 = vsel %vm57, %v588, 0
  %591 = vmatprep.subr.mxu0 0.0
  %592 = vmatpush1.msra.mxu0 %v24
  %593 = vmatprep.subr.mxu0 0.0
  %594 = vmatpush1.msra.mxu0 %v25
  %595 = vmatprep.subr.mxu0 0.0
  %596 = vmatpush1.msra.mxu0 %v26
  %597 = vmatprep.subr.mxu0 0.0
  %598 = vmatpush1.msra.mxu0 %v27
  %599 = vmatprep.subr.mxu0 0.0
  %600 = vmatpush1.msra.mxu0 0.0
  %601 = vmatprep.subr.mxu0 0.0
  %602 = vmatpush1.msra.mxu0 0.0
  %603 = vmatprep.subr.mxu0 0.0
  %604 = vmatpush1.msra.mxu0 0.0
  %605 = vmatprep.subr.mxu0 0.0
  %606 = vmatpush1.msra.mxu0 0.0
  %607 = vmatprep.subr.mxu0 0.0
  %608 = vmatpush1.msra.mxu0 0.0
  %609 = vmatprep.subr.mxu0 0.0
  %610 = vmatpush1.msra.mxu0 0.0
  %611 = vmatprep.subr.mxu0 0.0
  %612 = vmatpush1.msra.mxu0 0.0
  %613 = vmatprep.subr.mxu0 0.0
  %614 = vmatpush1.msra.mxu0 0.0
  %615 = vmatprep.subr.mxu0 0.0
  %616 = vmatpush1.msra.mxu0 0.0
  %617 = vmatprep.subr.mxu0 0.0
  %618 = vmatpush1.msra.mxu0 0.0
  %619 = vmatprep.subr.mxu0 0.0
  %620 = vmatpush1.msra.mxu0 0.0
  %621 = vmatprep.subr.mxu0 0.0
  %622 = vmatpush1.msra.mxu0 0.0
  %623 = vmatprep.subr.mxu0 0.0
  %624 = vmatpush1.msra.mxu0 0.0
  %625 = vmatprep.subr.mxu0 0.0
  %626 = vmatpush1.msra.mxu0 0.0
  %627 = vmatprep.subr.mxu0 0.0
  %628 = vmatpush1.msra.mxu0 0.0
  %629 = vmatprep.subr.mxu0 0.0
  %630 = vmatpush1.msra.mxu0 0.0
  %631 = vmatprep.subr.mxu0 0.0
  %632 = vmatpush1.msra.mxu0 0.0
  %633 = vmatprep.subr.mxu0 0.0
  %634 = vmatpush1.msra.mxu0 0.0
  %635 = vmatprep.subr.mxu0 0.0
  %636 = vmatpush1.msra.mxu0 0.0
  %637 = vmatprep.subr.mxu0 0.0
  %638 = vmatpush1.msra.mxu0 0.0
  %639 = vmatprep.subr.mxu0 0.0
  %640 = vmatpush1.msra.mxu0 0.0
  %641 = vmatprep.subr.mxu0 0.0
  %642 = vmatpush1.msra.mxu0 0.0
  %643 = vmatprep.subr.mxu0 0.0
  %644 = vmatpush1.msra.mxu0 0.0
  %645 = vmatprep.subr.mxu0 0.0
  %646 = vmatpush1.msra.mxu0 0.0
  %647 = vmatprep.subr.mxu0 0.0
  %648 = vmatpush1.msra.mxu0 0.0
  %649 = vmatprep.subr.mxu0 0.0
  %650 = vmatpush1.msra.mxu0 0.0
  %651 = vmatprep.subr.mxu0 0.0
  %652 = vmatpush1.msra.mxu0 0.0
  %653 = vmatprep.subr.mxu0 0.0
  %654 = vmatpush1.msra.mxu0 0.0
  %655 = vmatprep.mubr.f32.mxu0 0.0
  %656 = vmatmul.mubr.f32.gmra.mrb[0].mxu0 %v589
  %v657 = vpop.f32.mrb[0].mxu0
  %v658 = vadd.f32 0.0, %v657
  %v659 = vpop.f32.mrb[0].mxu0
  %660 = vdwg.mxu0
  %v661 = vadd.f32 %v585, %v658
  %v662 = vmul.f32 %v661, %v35
  %v663 = vtanh.pop %v662
  %v664 = vmul.f32 %v663, %v35
  %v665 = vadd.f32 %v664, %v36
  %v666 = vmul.f32 %v665, %v570
  %668 = vrot.lane.b32.xlu0 %v665, 64
  %v669 = vpop.permute.xlu0 %668
  %v671 = vmul.f32 %v665, %v669
  %673 = vrot.lane.b32.xlu0 %v671, 32
  %v674 = vpop.permute.xlu0 %673
  %v676 = vadd.f32 %v666, %v674
  %v677 = vtanh.pop %v676
  %679 = vrot.lane.b32.xlu0 %v677, 64
  %v680 = vpop.permute.xlu0 %679
  %v682 = vmul.f32 %v665, %v680
  %s683 = scalar_lea.vmem %s0, 48
  %v684 = vld [vmem:[%s683] sm:$0xff]
  %686 = vset.pattern.permute.xlu0 0
  %687 = vperm.xlu0 %686, %v684
  %v688 = vpop.permute.xlu0 %687
  %v690 = vmul.f32 %v688, %v47
  %v691 = vadd.f32 %v690, %v54
  %693 = vrot.lane.b32.xlu0 %v682, 32
  %v694 = vpop.permute.xlu0 %693
  %v695 = vsel %vm57, %v694, 0
  %697 = vmatprep.subr.mxu0 0.0
  %698 = vmatpush1.msra.mxu0 %v24
  %699 = vmatprep.subr.mxu0 0.0
  %700 = vmatpush1.msra.mxu0 %v25
  %701 = vmatprep.subr.mxu0 0.0
  %702 = vmatpush1.msra.mxu0 %v26
  %703 = vmatprep.subr.mxu0 0.0
  %704 = vmatpush1.msra.mxu0 %v27
  %705 = vmatprep.subr.mxu0 0.0
  %706 = vmatpush1.msra.mxu0 0.0
  %707 = vmatprep.subr.mxu0 0.0
  %708 = vmatpush1.msra.mxu0 0.0
  %709 = vmatprep.subr.mxu0 0.0
  %710 = vmatpush1.msra.mxu0 0.0
  %711 = vmatprep.subr.mxu0 0.0
  %712 = vmatpush1.msra.mxu0 0.0
  %713 = vmatprep.subr.mxu0 0.0
  %714 = vmatpush1.msra.mxu0 0.0
  %715 = vmatprep.subr.mxu0 0.0
  %716 = vmatpush1.msra.mxu0 0.0
  %717 = vmatprep.subr.mxu0 0.0
  %718 = vmatpush1.msra.mxu0 0.0
  %719 = vmatprep.subr.mxu0 0.0
  %720 = vmatpush1.msra.mxu0 0.0
  %721 = vmatprep.subr.mxu0 0.0
  %722 = vmatpush1.msra.mxu0 0.0
  %723 = vmatprep.subr.mxu0 0.0
  %724 = vmatpush1.msra.mxu0 0.0
  %725 = vmatprep.subr.mxu0 0.0
  %726 = vmatpush1.msra.mxu0 0.0
  %727 = vmatprep.subr.mxu0 0.0
  %728 = vmatpush1.msra.mxu0 0.0
  %729 = vmatprep.subr.mxu0 0.0
  %730 = vmatpush1.msra.mxu0 0.0
  %731 = vmatprep.subr.mxu0 0.0
  %732 = vmatpush1.msra.mxu0 0.0
  %733 = vmatprep.subr.mxu0 0.0
  %734 = vmatpush1.msra.mxu0 0.0
  %735 = vmatprep.subr.mxu0 0.0
  %736 = vmatpush1.msra.mxu0 0.0
  %737 = vmatprep.subr.mxu0 0.0
  %738 = vmatpush1.msra.mxu0 0.0
  %739 = vmatprep.subr.mxu0 0.0
  %740 = vmatpush1.msra.mxu0 0.0
  %741 = vmatprep.subr.mxu0 0.0
  %742 = vmatpush1.msra.mxu0 0.0
  %743 = vmatprep.subr.mxu0 0.0
  %744 = vmatpush1.msra.mxu0 0.0
  %745 = vmatprep.subr.mxu0 0.0
  %746 = vmatpush1.msra.mxu0 0.0
  %747 = vmatprep.subr.mxu0 0.0
  %748 = vmatpush1.msra.mxu0 0.0
  %749 = vmatprep.subr.mxu0 0.0
  %750 = vmatpush1.msra.mxu0 0.0
  %751 = vmatprep.subr.mxu0 0.0
  %752 = vmatpush1.msra.mxu0 0.0
  %753 = vmatprep.subr.mxu0 0.0
  %754 = vmatpush1.msra.mxu0 0.0
  %755 = vmatprep.subr.mxu0 0.0
  %756 = vmatpush1.msra.mxu0 0.0
  %757 = vmatprep.subr.mxu0 0.0
  %758 = vmatpush1.msra.mxu0 0.0
  %759 = vmatprep.subr.mxu0 0.0
  %760 = vmatpush1.msra.mxu0 0.0
  %761 = vmatprep.mubr.f32.mxu0 0.0
  %762 = vmatmul.mubr.f32.gmra.mrb[0].mxu0 %v695
  %v763 = vpop.f32.mrb[0].mxu0
  %v764 = vadd.f32 0.0, %v763
  %v765 = vpop.f32.mrb[0].mxu0
  %766 = vdwg.mxu0
  %v767 = vadd.f32 %v691, %v764
  %v768 = vmul.f32 %v767, %v35
  %v769 = vtanh.pop %v768
  %v770 = vmul.f32 %v769, %v35
  %v771 = vadd.f32 %v770, %v36
  %v772 = vmul.f32 %v771, %v676
  %774 = vrot.lane.b32.xlu0 %v771, 64
  %v775 = vpop.permute.xlu0 %774
  %v777 = vmul.f32 %v771, %v775
  %779 = vrot.lane.b32.xlu0 %v777, 32
  %v780 = vpop.permute.xlu0 %779
  %v782 = vadd.f32 %v772, %v780
  %v783 = vtanh.pop %v782
  %785 = vrot.lane.b32.xlu0 %v783, 64
  %v786 = vpop.permute.xlu0 %785
  %v788 = vmul.f32 %v771, %v786
  %s789 = scalar_lea.vmem %s0, 56
  %v790 = vld [vmem:[%s789] sm:$0xff]
  %792 = vset.pattern.permute.xlu0 0
  %793 = vperm.xlu0 %792, %v790
  %v794 = vpop.permute.xlu0 %793
  %v796 = vmul.f32 %v794, %v47
  %v797 = vadd.f32 %v796, %v54
  %799 = vrot.lane.b32.xlu0 %v788, 32
  %v800 = vpop.permute.xlu0 %799
  %v801 = vsel %vm57, %v800, 0
  %803 = vmatprep.subr.mxu0 0.0
  %804 = vmatpush1.msra.mxu0 %v24
  %805 = vmatprep.subr.mxu0 0.0
  %806 = vmatpush1.msra.mxu0 %v25
  %807 = vmatprep.subr.mxu0 0.0
  %808 = vmatpush1.msra.mxu0 %v26
  %809 = vmatprep.subr.mxu0 0.0
  %810 = vmatpush1.msra.mxu0 %v27
  %811 = vmatprep.subr.mxu0 0.0
  %812 = vmatpush1.msra.mxu0 0.0
  %813 = vmatprep.subr.mxu0 0.0
  %814 = vmatpush1.msra.mxu0 0.0
  %815 = vmatprep.subr.mxu0 0.0
  %816 = vmatpush1.msra.mxu0 0.0
  %817 = vmatprep.subr.mxu0 0.0
  %818 = vmatpush1.msra.mxu0 0.0
  %819 = vmatprep.subr.mxu0 0.0
  %820 = vmatpush1.msra.mxu0 0.0
  %821 = vmatprep.subr.mxu0 0.0
  %822 = vmatpush1.msra.mxu0 0.0
  %823 = vmatprep.subr.mxu0 0.0
  %824 = vmatpush1.msra.mxu0 0.0
  %825 = vmatprep.subr.mxu0 0.0
  %826 = vmatpush1.msra.mxu0 0.0
  %827 = vmatprep.subr.mxu0 0.0
  %828 = vmatpush1.msra.mxu0 0.0
  %829 = vmatprep.subr.mxu0 0.0
  %830 = vmatpush1.msra.mxu0 0.0
  %831 = vmatprep.subr.mxu0 0.0
  %832 = vmatpush1.msra.mxu0 0.0
  %833 = vmatprep.subr.mxu0 0.0
  %834 = vmatpush1.msra.mxu0 0.0
  %835 = vmatprep.subr.mxu0 0.0
  %836 = vmatpush1.msra.mxu0 0.0
  %837 = vmatprep.subr.mxu0 0.0
  %838 = vmatpush1.msra.mxu0 0.0
  %839 = vmatprep.subr.mxu0 0.0
  %840 = vmatpush1.msra.mxu0 0.0
  %841 = vmatprep.subr.mxu0 0.0
  %842 = vmatpush1.msra.mxu0 0.0
  %843 = vmatprep.subr.mxu0 0.0
  %844 = vmatpush1.msra.mxu0 0.0
  %845 = vmatprep.subr.mxu0 0.0
  %846 = vmatpush1.msra.mxu0 0.0
  %847 = vmatprep.subr.mxu0 0.0
  %848 = vmatpush1.msra.mxu0 0.0
  %849 = vmatprep.subr.mxu0 0.0
  %850 = vmatpush1.msra.mxu0 0.0
  %851 = vmatprep.subr.mxu0 0.0
  %852 = vmatpush1.msra.mxu0 0.0
  %853 = vmatprep.subr.mxu0 0.0
  %854 = vmatpush1.msra.mxu0 0.0
  %855 = vmatprep.subr.mxu0 0.0
  %856 = vmatpush1.msra.mxu0 0.0
  %857 = vmatprep.subr.mxu0 0.0
  %858 = vmatpush1.msra.mxu0 0.0
  %859 = vmatprep.subr.mxu0 0.0
  %860 = vmatpush1.msra.mxu0 0.0
  %861 = vmatprep.subr.mxu0 0.0
  %862 = vmatpush1.msra.mxu0 0.0
  %863 = vmatprep.subr.mxu0 0.0
  %864 = vmatpush1.msra.mxu0 0.0
  %865 = vmatprep.subr.mxu0 0.0
  %866 = vmatpush1.msra.mxu0 0.0
  %867 = vmatprep.mubr.f32.mxu0 0.0
  %868 = vmatmul.mubr.f32.gmra.mrb[0].mxu0 %v801
  %v869 = vpop.f32.mrb[0].mxu0
  %v870 = vadd.f32 0.0, %v869
  %v871 = vpop.f32.mrb[0].mxu0
  %872 = vdwg.mxu0
  %v873 = vadd.f32 %v797, %v870
  %v874 = vmul.f32 %v873, %v35
  %v875 = vtanh.pop %v874
  %v876 = vmul.f32 %v875, %v35
  %v877 = vadd.f32 %v876, %v36
  %v878 = vmul.f32 %v877, %v782
  %880 = vrot.lane.b32.xlu0 %v877, 64
  %v881 = vpop.permute.xlu0 %880
  %v883 = vmul.f32 %v877, %v881
  %885 = vrot.lane.b32.xlu0 %v883, 32
  %v886 = vpop.permute.xlu0 %885
  %v888 = vadd.f32 %v878, %v886
  %v889 = vtanh.pop %v888
  %891 = vrot.lane.b32.xlu0 %v889, 64
  %v892 = vpop.permute.xlu0 %891
  %v894 = vmul.f32 %v877, %v892
  %s895 = scalar_lea.vmem %s0, 64
  %v896 = vld [vmem:[%s895] sm:$0xff]
  %898 = vset.pattern.permute.xlu0 0
  %899 = vperm.xlu0 %898, %v896
  %v900 = vpop.permute.xlu0 %899
  %v902 = vmul.f32 %v900, %v47
  %v903 = vadd.f32 %v902, %v54
  %905 = vrot.lane.b32.xlu0 %v894, 32
  %v906 = vpop.permute.xlu0 %905
  %v907 = vsel %vm57, %v906, 0
  %909 = vmatprep.subr.mxu0 0.0
  %910 = vmatpush1.msra.mxu0 %v24
  %911 = vmatprep.subr.mxu0 0.0
  %912 = vmatpush1.msra.mxu0 %v25
  %913 = vmatprep.subr.mxu0 0.0
  %914 = vmatpush1.msra.mxu0 %v26
  %915 = vmatprep.subr.mxu0 0.0
  %916 = vmatpush1.msra.mxu0 %v27
  %917 = vmatprep.subr.mxu0 0.0
  %918 = vmatpush1.msra.mxu0 0.0
  %919 = vmatprep.subr.mxu0 0.0
  %920 = vmatpush1.msra.mxu0 0.0
  %921 = vmatprep.subr.mxu0 0.0
  %922 = vmatpush1.msra.mxu0 0.0
  %923 = vmatprep.subr.mxu0 0.0
  %924 = vmatpush1.msra.mxu0 0.0
  %925 = vmatprep.subr.mxu0 0.0
  %926 = vmatpush1.msra.mxu0 0.0
  %927 = vmatprep.subr.mxu0 0.0
  %928 = vmatpush1.msra.mxu0 0.0
  %929 = vmatprep.subr.mxu0 0.0
  %930 = vmatpush1.msra.mxu0 0.0
  %931 = vmatprep.subr.mxu0 0.0
  %932 = vmatpush1.msra.mxu0 0.0
  %933 = vmatprep.subr.mxu0 0.0
  %934 = vmatpush1.msra.mxu0 0.0
  %935 = vmatprep.subr.mxu0 0.0
  %936 = vmatpush1.msra.mxu0 0.0
  %937 = vmatprep.subr.mxu0 0.0
  %938 = vmatpush1.msra.mxu0 0.0
  %939 = vmatprep.subr.mxu0 0.0
  %940 = vmatpush1.msra.mxu0 0.0
  %941 = vmatprep.subr.mxu0 0.0
  %942 = vmatpush1.msra.mxu0 0.0
  %943 = vmatprep.subr.mxu0 0.0
  %944 = vmatpush1.msra.mxu0 0.0
  %945 = vmatprep.subr.mxu0 0.0
  %946 = vmatpush1.msra.mxu0 0.0
  %947 = vmatprep.subr.mxu0 0.0
  %948 = vmatpush1.msra.mxu0 0.0
  %949 = vmatprep.subr.mxu0 0.0
  %950 = vmatpush1.msra.mxu0 0.0
  %951 = vmatprep.subr.mxu0 0.0
  %952 = vmatpush1.msra.mxu0 0.0
  %953 = vmatprep.subr.mxu0 0.0
  %954 = vmatpush1.msra.mxu0 0.0
  %955 = vmatprep.subr.mxu0 0.0
  %956 = vmatpush1.msra.mxu0 0.0
  %957 = vmatprep.subr.mxu0 0.0
  %958 = vmatpush1.msra.mxu0 0.0
  %959 = vmatprep.subr.mxu0 0.0
  %960 = vmatpush1.msra.mxu0 0.0
  %961 = vmatprep.subr.mxu0 0.0
  %962 = vmatpush1.msra.mxu0 0.0
  %963 = vmatprep.subr.mxu0 0.0
  %964 = vmatpush1.msra.mxu0 0.0
  %965 = vmatprep.subr.mxu0 0.0
  %966 = vmatpush1.msra.mxu0 0.0
  %967 = vmatprep.subr.mxu0 0.0
  %968 = vmatpush1.msra.mxu0 0.0
  %969 = vmatprep.subr.mxu0 0.0
  %970 = vmatpush1.msra.mxu0 0.0
  %971 = vmatprep.subr.mxu0 0.0
  %972 = vmatpush1.msra.mxu0 0.0
  %973 = vmatprep.mubr.f32.mxu0 0.0
  %974 = vmatmul.mubr.f32.gmra.mrb[0].mxu0 %v907
  %v975 = vpop.f32.mrb[0].mxu0
  %v976 = vadd.f32 0.0, %v975
  %v977 = vpop.f32.mrb[0].mxu0
  %978 = vdwg.mxu0
  %v979 = vadd.f32 %v903, %v976
  %v980 = vmul.f32 %v979, %v35
  %v981 = vtanh.pop %v980
  %v982 = vmul.f32 %v981, %v35
  %v983 = vadd.f32 %v982, %v36
  %v984 = vmul.f32 %v983, %v888
  %986 = vrot.lane.b32.xlu0 %v983, 64
  %v987 = vpop.permute.xlu0 %986
  %v989 = vmul.f32 %v983, %v987
  %991 = vrot.lane.b32.xlu0 %v989, 32
  %v992 = vpop.permute.xlu0 %991
  %v994 = vadd.f32 %v984, %v992
  %v995 = vtanh.pop %v994
  %997 = vrot.lane.b32.xlu0 %v995, 64
  %v998 = vpop.permute.xlu0 %997
  %v1000 = vmul.f32 %v983, %v998
  %s1001 = scalar_lea.vmem %s0, 72
  %v1002 = vld [vmem:[%s1001] sm:$0xff]
  %1004 = vset.pattern.permute.xlu0 0
  %1005 = vperm.xlu0 %1004, %v1002
  %v1006 = vpop.permute.xlu0 %1005
  %v1008 = vmul.f32 %v1006, %v47
  %v1009 = vadd.f32 %v1008, %v54
  %1011 = vrot.lane.b32.xlu0 %v1000, 32
  %v1012 = vpop.permute.xlu0 %1011
  %v1013 = vsel %vm57, %v1012, 0
  %1015 = vmatprep.subr.mxu0 0.0
  %1016 = vmatpush1.msra.mxu0 %v24
  %1017 = vmatprep.subr.mxu0 0.0
  %1018 = vmatpush1.msra.mxu0 %v25
  %1019 = vmatprep.subr.mxu0 0.0
  %1020 = vmatpush1.msra.mxu0 %v26
  %1021 = vmatprep.subr.mxu0 0.0
  %1022 = vmatpush1.msra.mxu0 %v27
  %1023 = vmatprep.subr.mxu0 0.0
  %1024 = vmatpush1.msra.mxu0 0.0
  %1025 = vmatprep.subr.mxu0 0.0
  %1026 = vmatpush1.msra.mxu0 0.0
  %1027 = vmatprep.subr.mxu0 0.0
  %1028 = vmatpush1.msra.mxu0 0.0
  %1029 = vmatprep.subr.mxu0 0.0
  %1030 = vmatpush1.msra.mxu0 0.0
  %1031 = vmatprep.subr.mxu0 0.0
  %1032 = vmatpush1.msra.mxu0 0.0
  %1033 = vmatprep.subr.mxu0 0.0
  %1034 = vmatpush1.msra.mxu0 0.0
  %1035 = vmatprep.subr.mxu0 0.0
  %1036 = vmatpush1.msra.mxu0 0.0
  %1037 = vmatprep.subr.mxu0 0.0
  %1038 = vmatpush1.msra.mxu0 0.0
  %1039 = vmatprep.subr.mxu0 0.0
  %1040 = vmatpush1.msra.mxu0 0.0
  %1041 = vmatprep.subr.mxu0 0.0
  %1042 = vmatpush1.msra.mxu0 0.0
  %1043 = vmatprep.subr.mxu0 0.0
  %1044 = vmatpush1.msra.mxu0 0.0
  %1045 = vmatprep.subr.mxu0 0.0
  %1046 = vmatpush1.msra.mxu0 0.0
  %1047 = vmatprep.subr.mxu0 0.0
  %1048 = vmatpush1.msra.mxu0 0.0
  %1049 = vmatprep.subr.mxu0 0.0
  %1050 = vmatpush1.msra.mxu0 0.0
  %1051 = vmatprep.subr.mxu0 0.0
  %1052 = vmatpush1.msra.mxu0 0.0
  %1053 = vmatprep.subr.mxu0 0.0
  %1054 = vmatpush1.msra.mxu0 0.0
  %1055 = vmatprep.subr.mxu0 0.0
  %1056 = vmatpush1.msra.mxu0 0.0
  %1057 = vmatprep.subr.mxu0 0.0
  %1058 = vmatpush1.msra.mxu0 0.0
  %1059 = vmatprep.subr.mxu0 0.0
  %1060 = vmatpush1.msra.mxu0 0.0
  %1061 = vmatprep.subr.mxu0 0.0
  %1062 = vmatpush1.msra.mxu0 0.0
  %1063 = vmatprep.subr.mxu0 0.0
  %1064 = vmatpush1.msra.mxu0 0.0
  %1065 = vmatprep.subr.mxu0 0.0
  %1066 = vmatpush1.msra.mxu0 0.0
  %1067 = vmatprep.subr.mxu0 0.0
  %1068 = vmatpush1.msra.mxu0 0.0
  %1069 = vmatprep.subr.mxu0 0.0
  %1070 = vmatpush1.msra.mxu0 0.0
  %1071 = vmatprep.subr.mxu0 0.0
  %1072 = vmatpush1.msra.mxu0 0.0
  %1073 = vmatprep.subr.mxu0 0.0
  %1074 = vmatpush1.msra.mxu0 0.0
  %1075 = vmatprep.subr.mxu0 0.0
  %1076 = vmatpush1.msra.mxu0 0.0
  %1077 = vmatprep.subr.mxu0 0.0
  %1078 = vmatpush1.msra.mxu0 0.0
  %1079 = vmatprep.mubr.f32.mxu0 0.0
  %1080 = vmatmul.mubr.f32.gmra.mrb[0].mxu0 %v1013
  %v1081 = vpop.f32.mrb[0].mxu0
  %v1082 = vadd.f32 0.0, %v1081
  %v1083 = vpop.f32.mrb[0].mxu0
  %1084 = vdwg.mxu0
  %v1085 = vadd.f32 %v1009, %v1082
  %v1086 = vmul.f32 %v1085, %v35
  %v1087 = vtanh.pop %v1086
  %v1088 = vmul.f32 %v1087, %v35
  %v1089 = vadd.f32 %v1088, %v36
  %v1090 = vmul.f32 %v1089, %v994
  %1092 = vrot.lane.b32.xlu0 %v1089, 64
  %v1093 = vpop.permute.xlu0 %1092
  %v1095 = vmul.f32 %v1089, %v1093
  %1097 = vrot.lane.b32.xlu0 %v1095, 32
  %v1098 = vpop.permute.xlu0 %1097
  %v1100 = vadd.f32 %v1090, %v1098
  %v1101 = vtanh.pop %v1100
  %1103 = vrot.lane.b32.xlu0 %v1101, 64
  %v1104 = vpop.permute.xlu0 %1103
  %v1106 = vmul.f32 %v1089, %v1104
  %s1107 = scalar_lea.vmem %s0, 80
  %v1108 = vld [vmem:[%s1107] sm:$0xff]
  %1110 = vset.pattern.permute.xlu0 0
  %1111 = vperm.xlu0 %1110, %v1108
  %v1112 = vpop.permute.xlu0 %1111
  %v1114 = vmul.f32 %v1112, %v47
  %v1115 = vadd.f32 %v1114, %v54
  %1117 = vrot.lane.b32.xlu0 %v1106, 32
  %v1118 = vpop.permute.xlu0 %1117
  %v1119 = vsel %vm57, %v1118, 0
  %1121 = vmatprep.subr.mxu0 0.0
  %1122 = vmatpush1.msra.mxu0 %v24
  %1123 = vmatprep.subr.mxu0 0.0
  %1124 = vmatpush1.msra.mxu0 %v25
  %1125 = vmatprep.subr.mxu0 0.0
  %1126 = vmatpush1.msra.mxu0 %v26
  %1127 = vmatprep.subr.mxu0 0.0
  %1128 = vmatpush1.msra.mxu0 %v27
  %1129 = vmatprep.subr.mxu0 0.0
  %1130 = vmatpush1.msra.mxu0 0.0
  %1131 = vmatprep.subr.mxu0 0.0
  %1132 = vmatpush1.msra.mxu0 0.0
  %1133 = vmatprep.subr.mxu0 0.0
  %1134 = vmatpush1.msra.mxu0 0.0
  %1135 = vmatprep.subr.mxu0 0.0
  %1136 = vmatpush1.msra.mxu0 0.0
  %1137 = vmatprep.subr.mxu0 0.0
  %1138 = vmatpush1.msra.mxu0 0.0
  %1139 = vmatprep.subr.mxu0 0.0
  %1140 = vmatpush1.msra.mxu0 0.0
  %1141 = vmatprep.subr.mxu0 0.0
  %1142 = vmatpush1.msra.mxu0 0.0
  %1143 = vmatprep.subr.mxu0 0.0
  %1144 = vmatpush1.msra.mxu0 0.0
  %1145 = vmatprep.subr.mxu0 0.0
  %1146 = vmatpush1.msra.mxu0 0.0
  %1147 = vmatprep.subr.mxu0 0.0
  %1148 = vmatpush1.msra.mxu0 0.0
  %1149 = vmatprep.subr.mxu0 0.0
  %1150 = vmatpush1.msra.mxu0 0.0
  %1151 = vmatprep.subr.mxu0 0.0
  %1152 = vmatpush1.msra.mxu0 0.0
  %1153 = vmatprep.subr.mxu0 0.0
  %1154 = vmatpush1.msra.mxu0 0.0
  %1155 = vmatprep.subr.mxu0 0.0
  %1156 = vmatpush1.msra.mxu0 0.0
  %1157 = vmatprep.subr.mxu0 0.0
  %1158 = vmatpush1.msra.mxu0 0.0
  %1159 = vmatprep.subr.mxu0 0.0
  %1160 = vmatpush1.msra.mxu0 0.0
  %1161 = vmatprep.subr.mxu0 0.0
  %1162 = vmatpush1.msra.mxu0 0.0
  %1163 = vmatprep.subr.mxu0 0.0
  %1164 = vmatpush1.msra.mxu0 0.0
  %1165 = vmatprep.subr.mxu0 0.0
  %1166 = vmatpush1.msra.mxu0 0.0
  %1167 = vmatprep.subr.mxu0 0.0
  %1168 = vmatpush1.msra.mxu0 0.0
  %1169 = vmatprep.subr.mxu0 0.0
  %1170 = vmatpush1.msra.mxu0 0.0
  %1171 = vmatprep.subr.mxu0 0.0
  %1172 = vmatpush1.msra.mxu0 0.0
  %1173 = vmatprep.subr.mxu0 0.0
  %1174 = vmatpush1.msra.mxu0 0.0
  %1175 = vmatprep.subr.mxu0 0.0
  %1176 = vmatpush1.msra.mxu0 0.0
  %1177 = vmatprep.subr.mxu0 0.0
  %1178 = vmatpush1.msra.mxu0 0.0
  %1179 = vmatprep.subr.mxu0 0.0
  %1180 = vmatpush1.msra.mxu0 0.0
  %1181 = vmatprep.subr.mxu0 0.0
  %1182 = vmatpush1.msra.mxu0 0.0
  %1183 = vmatprep.subr.mxu0 0.0
  %1184 = vmatpush1.msra.mxu0 0.0
  %1185 = vmatprep.mubr.f32.mxu0 0.0
  %1186 = vmatmul.mubr.f32.gmra.mrb[0].mxu0 %v1119
  %v1187 = vpop.f32.mrb[0].mxu0
  %v1188 = vadd.f32 0.0, %v1187
  %v1189 = vpop.f32.mrb[0].mxu0
  %1190 = vdwg.mxu0
  %v1191 = vadd.f32 %v1115, %v1188
  %v1192 = vmul.f32 %v1191, %v35
  %v1193 = vtanh.pop %v1192
  %v1194 = vmul.f32 %v1193, %v35
  %v1195 = vadd.f32 %v1194, %v36
  %v1196 = vmul.f32 %v1195, %v1100
  %1198 = vrot.lane.b32.xlu0 %v1195, 64
  %v1199 = vpop.permute.xlu0 %1198
  %v1201 = vmul.f32 %v1195, %v1199
  %1203 = vrot.lane.b32.xlu0 %v1201, 32
  %v1204 = vpop.permute.xlu0 %1203
  %v1206 = vadd.f32 %v1196, %v1204
  %v1207 = vtanh.pop %v1206
  %1209 = vrot.lane.b32.xlu0 %v1207, 64
  %v1210 = vpop.permute.xlu0 %1209
  %v1212 = vmul.f32 %v1195, %v1210
  %s1213 = scalar_lea.vmem %s0, 88
  %v1214 = vld [vmem:[%s1213] sm:$0xff]
  %1216 = vset.pattern.permute.xlu0 0
  %1217 = vperm.xlu0 %1216, %v1214
  %v1218 = vpop.permute.xlu0 %1217
  %v1220 = vmul.f32 %v1218, %v47
  %v1221 = vadd.f32 %v1220, %v54
  %1223 = vrot.lane.b32.xlu0 %v1212, 32
  %v1224 = vpop.permute.xlu0 %1223
  %v1225 = vsel %vm57, %v1224, 0
  %1227 = vmatprep.subr.mxu0 0.0
  %1228 = vmatpush1.msra.mxu0 %v24
  %1229 = vmatprep.subr.mxu0 0.0
  %1230 = vmatpush1.msra.mxu0 %v25
  %1231 = vmatprep.subr.mxu0 0.0
  %1232 = vmatpush1.msra.mxu0 %v26
  %1233 = vmatprep.subr.mxu0 0.0
  %1234 = vmatpush1.msra.mxu0 %v27
  %1235 = vmatprep.subr.mxu0 0.0
  %1236 = vmatpush1.msra.mxu0 0.0
  %1237 = vmatprep.subr.mxu0 0.0
  %1238 = vmatpush1.msra.mxu0 0.0
  %1239 = vmatprep.subr.mxu0 0.0
  %1240 = vmatpush1.msra.mxu0 0.0
  %1241 = vmatprep.subr.mxu0 0.0
  %1242 = vmatpush1.msra.mxu0 0.0
  %1243 = vmatprep.subr.mxu0 0.0
  %1244 = vmatpush1.msra.mxu0 0.0
  %1245 = vmatprep.subr.mxu0 0.0
  %1246 = vmatpush1.msra.mxu0 0.0
  %1247 = vmatprep.subr.mxu0 0.0
  %1248 = vmatpush1.msra.mxu0 0.0
  %1249 = vmatprep.subr.mxu0 0.0
  %1250 = vmatpush1.msra.mxu0 0.0
  %1251 = vmatprep.subr.mxu0 0.0
  %1252 = vmatpush1.msra.mxu0 0.0
  %1253 = vmatprep.subr.mxu0 0.0
  %1254 = vmatpush1.msra.mxu0 0.0
  %1255 = vmatprep.subr.mxu0 0.0
  %1256 = vmatpush1.msra.mxu0 0.0
  %1257 = vmatprep.subr.mxu0 0.0
  %1258 = vmatpush1.msra.mxu0 0.0
  %1259 = vmatprep.subr.mxu0 0.0
  %1260 = vmatpush1.msra.mxu0 0.0
  %1261 = vmatprep.subr.mxu0 0.0
  %1262 = vmatpush1.msra.mxu0 0.0
  %1263 = vmatprep.subr.mxu0 0.0
  %1264 = vmatpush1.msra.mxu0 0.0
  %1265 = vmatprep.subr.mxu0 0.0
  %1266 = vmatpush1.msra.mxu0 0.0
  %1267 = vmatprep.subr.mxu0 0.0
  %1268 = vmatpush1.msra.mxu0 0.0
  %1269 = vmatprep.subr.mxu0 0.0
  %1270 = vmatpush1.msra.mxu0 0.0
  %1271 = vmatprep.subr.mxu0 0.0
  %1272 = vmatpush1.msra.mxu0 0.0
  %1273 = vmatprep.subr.mxu0 0.0
  %1274 = vmatpush1.msra.mxu0 0.0
  %1275 = vmatprep.subr.mxu0 0.0
  %1276 = vmatpush1.msra.mxu0 0.0
  %1277 = vmatprep.subr.mxu0 0.0
  %1278 = vmatpush1.msra.mxu0 0.0
  %1279 = vmatprep.subr.mxu0 0.0
  %1280 = vmatpush1.msra.mxu0 0.0
  %1281 = vmatprep.subr.mxu0 0.0
  %1282 = vmatpush1.msra.mxu0 0.0
  %1283 = vmatprep.subr.mxu0 0.0
  %1284 = vmatpush1.msra.mxu0 0.0
  %1285 = vmatprep.subr.mxu0 0.0
  %1286 = vmatpush1.msra.mxu0 0.0
  %1287 = vmatprep.subr.mxu0 0.0
  %1288 = vmatpush1.msra.mxu0 0.0
  %1289 = vmatprep.subr.mxu0 0.0
  %1290 = vmatpush1.msra.mxu0 0.0
  %1291 = vmatprep.mubr.f32.mxu0 0.0
  %1292 = vmatmul.mubr.f32.gmra.mrb[0].mxu0 %v1225
  %v1293 = vpop.f32.mrb[0].mxu0
  %v1294 = vadd.f32 0.0, %v1293
  %v1295 = vpop.f32.mrb[0].mxu0
  %1296 = vdwg.mxu0
  %v1297 = vadd.f32 %v1221, %v1294
  %v1298 = vmul.f32 %v1297, %v35
  %v1299 = vtanh.pop %v1298
  %v1300 = vmul.f32 %v1299, %v35
  %v1301 = vadd.f32 %v1300, %v36
  %v1302 = vmul.f32 %v1301, %v1206
  %1304 = vrot.lane.b32.xlu0 %v1301, 64
  %v1305 = vpop.permute.xlu0 %1304
  %v1307 = vmul.f32 %v1301, %v1305
  %1309 = vrot.lane.b32.xlu0 %v1307, 32
  %v1310 = vpop.permute.xlu0 %1309
  %v1312 = vadd.f32 %v1302, %v1310
  %v1313 = vtanh.pop %v1312
  %1315 = vrot.lane.b32.xlu0 %v1313, 64
  %v1316 = vpop.permute.xlu0 %1315
  %v1318 = vmul.f32 %v1301, %v1316
  %s1319 = scalar_lea.vmem %s0, 96
  %v1320 = vld [vmem:[%s1319] sm:$0xff]
  %1322 = vset.pattern.permute.xlu0 0
  %1323 = vperm.xlu0 %1322, %v1320
  %v1324 = vpop.permute.xlu0 %1323
  %v1326 = vmul.f32 %v1324, %v47
  %v1327 = vadd.f32 %v1326, %v54
  %1329 = vrot.lane.b32.xlu0 %v1318, 32
  %v1330 = vpop.permute.xlu0 %1329
  %v1331 = vsel %vm57, %v1330, 0
  %1333 = vmatprep.subr.mxu0 0.0
  %1334 = vmatpush1.msra.mxu0 %v24
  %1335 = vmatprep.subr.mxu0 0.0
  %1336 = vmatpush1.msra.mxu0 %v25
  %1337 = vmatprep.subr.mxu0 0.0
  %1338 = vmatpush1.msra.mxu0 %v26
  %1339 = vmatprep.subr.mxu0 0.0
  %1340 = vmatpush1.msra.mxu0 %v27
  %1341 = vmatprep.subr.mxu0 0.0
  %1342 = vmatpush1.msra.mxu0 0.0
  %1343 = vmatprep.subr.mxu0 0.0
  %1344 = vmatpush1.msra.mxu0 0.0
  %1345 = vmatprep.subr.mxu0 0.0
  %1346 = vmatpush1.msra.mxu0 0.0
  %1347 = vmatprep.subr.mxu0 0.0
  %1348 = vmatpush1.msra.mxu0 0.0
  %1349 = vmatprep.subr.mxu0 0.0
  %1350 = vmatpush1.msra.mxu0 0.0
  %1351 = vmatprep.subr.mxu0 0.0
  %1352 = vmatpush1.msra.mxu0 0.0
  %1353 = vmatprep.subr.mxu0 0.0
  %1354 = vmatpush1.msra.mxu0 0.0
  %1355 = vmatprep.subr.mxu0 0.0
  %1356 = vmatpush1.msra.mxu0 0.0
  %1357 = vmatprep.subr.mxu0 0.0
  %1358 = vmatpush1.msra.mxu0 0.0
  %1359 = vmatprep.subr.mxu0 0.0
  %1360 = vmatpush1.msra.mxu0 0.0
  %1361 = vmatprep.subr.mxu0 0.0
  %1362 = vmatpush1.msra.mxu0 0.0
  %1363 = vmatprep.subr.mxu0 0.0
  %1364 = vmatpush1.msra.mxu0 0.0
  %1365 = vmatprep.subr.mxu0 0.0
  %1366 = vmatpush1.msra.mxu0 0.0
  %1367 = vmatprep.subr.mxu0 0.0
  %1368 = vmatpush1.msra.mxu0 0.0
  %1369 = vmatprep.subr.mxu0 0.0
  %1370 = vmatpush1.msra.mxu0 0.0
  %1371 = vmatprep.subr.mxu0 0.0
  %1372 = vmatpush1.msra.mxu0 0.0
  %1373 = vmatprep.subr.mxu0 0.0
  %1374 = vmatpush1.msra.mxu0 0.0
  %1375 = vmatprep.subr.mxu0 0.0
  %1376 = vmatpush1.msra.mxu0 0.0
  %1377 = vmatprep.subr.mxu0 0.0
  %1378 = vmatpush1.msra.mxu0 0.0
  %1379 = vmatprep.subr.mxu0 0.0
  %1380 = vmatpush1.msra.mxu0 0.0
  %1381 = vmatprep.subr.mxu0 0.0
  %1382 = vmatpush1.msra.mxu0 0.0
  %1383 = vmatprep.subr.mxu0 0.0
  %1384 = vmatpush1.msra.mxu0 0.0
  %1385 = vmatprep.subr.mxu0 0.0
  %1386 = vmatpush1.msra.mxu0 0.0
  %1387 = vmatprep.subr.mxu0 0.0
  %1388 = vmatpush1.msra.mxu0 0.0
  %1389 = vmatprep.subr.mxu0 0.0
  %1390 = vmatpush1.msra.mxu0 0.0
  %1391 = vmatprep.subr.mxu0 0.0
  %1392 = vmatpush1.msra.mxu0 0.0
  %1393 = vmatprep.subr.mxu0 0.0
  %1394 = vmatpush1.msra.mxu0 0.0
  %1395 = vmatprep.subr.mxu0 0.0
  %1396 = vmatpush1.msra.mxu0 0.0
  %1397 = vmatprep.mubr.f32.mxu0 0.0
  %1398 = vmatmul.mubr.f32.gmra.mrb[0].mxu0 %v1331
  %v1399 = vpop.f32.mrb[0].mxu0
  %v1400 = vadd.f32 0.0, %v1399
  %v1401 = vpop.f32.mrb[0].mxu0
  %1402 = vdwg.mxu0
  %v1403 = vadd.f32 %v1327, %v1400
  %v1404 = vmul.f32 %v1403, %v35
  %v1405 = vtanh.pop %v1404
  %v1406 = vmul.f32 %v1405, %v35
  %v1407 = vadd.f32 %v1406, %v36
  %v1408 = vmul.f32 %v1407, %v1312
  %1410 = vrot.lane.b32.xlu0 %v1407, 64
  %v1411 = vpop.permute.xlu0 %1410
  %v1413 = vmul.f32 %v1407, %v1411
  %1415 = vrot.lane.b32.xlu0 %v1413, 32
  %v1416 = vpop.permute.xlu0 %1415
  %v1418 = vadd.f32 %v1408, %v1416
  %v1419 = vtanh.pop %v1418
  %1421 = vrot.lane.b32.xlu0 %v1419, 64
  %v1422 = vpop.permute.xlu0 %1421
  %v1424 = vmul.f32 %v1407, %v1422
  %s1425 = scalar_lea.vmem %s0, 104
  %v1426 = vld [vmem:[%s1425] sm:$0xff]
  %1428 = vset.pattern.permute.xlu0 0
  %1429 = vperm.xlu0 %1428, %v1426
  %v1430 = vpop.permute.xlu0 %1429
  %v1432 = vmul.f32 %v1430, %v47
  %v1433 = vadd.f32 %v1432, %v54
  %1435 = vrot.lane.b32.xlu0 %v1424, 32
  %v1436 = vpop.permute.xlu0 %1435
  %v1437 = vsel %vm57, %v1436, 0
  %1439 = vmatprep.subr.mxu0 0.0
  %1440 = vmatpush1.msra.mxu0 %v24
  %1441 = vmatprep.subr.mxu0 0.0
  %1442 = vmatpush1.msra.mxu0 %v25
  %1443 = vmatprep.subr.mxu0 0.0
  %1444 = vmatpush1.msra.mxu0 %v26
  %1445 = vmatprep.subr.mxu0 0.0
  %1446 = vmatpush1.msra.mxu0 %v27
  %1447 = vmatprep.subr.mxu0 0.0
  %1448 = vmatpush1.msra.mxu0 0.0
  %1449 = vmatprep.subr.mxu0 0.0
  %1450 = vmatpush1.msra.mxu0 0.0
  %1451 = vmatprep.subr.mxu0 0.0
  %1452 = vmatpush1.msra.mxu0 0.0
  %1453 = vmatprep.subr.mxu0 0.0
  %1454 = vmatpush1.msra.mxu0 0.0
  %1455 = vmatprep.subr.mxu0 0.0
  %1456 = vmatpush1.msra.mxu0 0.0
  %1457 = vmatprep.subr.mxu0 0.0
  %1458 = vmatpush1.msra.mxu0 0.0
  %1459 = vmatprep.subr.mxu0 0.0
  %1460 = vmatpush1.msra.mxu0 0.0
  %1461 = vmatprep.subr.mxu0 0.0
  %1462 = vmatpush1.msra.mxu0 0.0
  %1463 = vmatprep.subr.mxu0 0.0
  %1464 = vmatpush1.msra.mxu0 0.0
  %1465 = vmatprep.subr.mxu0 0.0
  %1466 = vmatpush1.msra.mxu0 0.0
  %1467 = vmatprep.subr.mxu0 0.0
  %1468 = vmatpush1.msra.mxu0 0.0
  %1469 = vmatprep.subr.mxu0 0.0
  %1470 = vmatpush1.msra.mxu0 0.0
  %1471 = vmatprep.subr.mxu0 0.0
  %1472 = vmatpush1.msra.mxu0 0.0
  %1473 = vmatprep.subr.mxu0 0.0
  %1474 = vmatpush1.msra.mxu0 0.0
  %1475 = vmatprep.subr.mxu0 0.0
  %1476 = vmatpush1.msra.mxu0 0.0
  %1477 = vmatprep.subr.mxu0 0.0
  %1478 = vmatpush1.msra.mxu0 0.0
  %1479 = vmatprep.subr.mxu0 0.0
  %1480 = vmatpush1.msra.mxu0 0.0
  %1481 = vmatprep.subr.mxu0 0.0
  %1482 = vmatpush1.msra.mxu0 0.0
  %1483 = vmatprep.subr.mxu0 0.0
  %1484 = vmatpush1.msra.mxu0 0.0
  %1485 = vmatprep.subr.mxu0 0.0
  %1486 = vmatpush1.msra.mxu0 0.0
  %1487 = vmatprep.subr.mxu0 0.0
  %1488 = vmatpush1.msra.mxu0 0.0
  %1489 = vmatprep.subr.mxu0 0.0
  %1490 = vmatpush1.msra.mxu0 0.0
  %1491 = vmatprep.subr.mxu0 0.0
  %1492 = vmatpush1.msra.mxu0 0.0
  %1493 = vmatprep.subr.mxu0 0.0
  %1494 = vmatpush1.msra.mxu0 0.0
  %1495 = vmatprep.subr.mxu0 0.0
  %1496 = vmatpush1.msra.mxu0 0.0
  %1497 = vmatprep.subr.mxu0 0.0
  %1498 = vmatpush1.msra.mxu0 0.0
  %1499 = vmatprep.subr.mxu0 0.0
  %1500 = vmatpush1.msra.mxu0 0.0
  %1501 = vmatprep.subr.mxu0 0.0
  %1502 = vmatpush1.msra.mxu0 0.0
  %1503 = vmatprep.mubr.f32.mxu0 0.0
  %1504 = vmatmul.mubr.f32.gmra.mrb[0].mxu0 %v1437
  %v1505 = vpop.f32.mrb[0].mxu0
  %v1506 = vadd.f32 0.0, %v1505
  %v1507 = vpop.f32.mrb[0].mxu0
  %1508 = vdwg.mxu0
  %v1509 = vadd.f32 %v1433, %v1506
  %v1510 = vmul.f32 %v1509, %v35
  %v1511 = vtanh.pop %v1510
  %v1512 = vmul.f32 %v1511, %v35
  %v1513 = vadd.f32 %v1512, %v36
  %v1514 = vmul.f32 %v1513, %v1418
  %1516 = vrot.lane.b32.xlu0 %v1513, 64
  %v1517 = vpop.permute.xlu0 %1516
  %v1519 = vmul.f32 %v1513, %v1517
  %1521 = vrot.lane.b32.xlu0 %v1519, 32
  %v1522 = vpop.permute.xlu0 %1521
  %v1524 = vadd.f32 %v1514, %v1522
  %v1525 = vtanh.pop %v1524
  %1527 = vrot.lane.b32.xlu0 %v1525, 64
  %v1528 = vpop.permute.xlu0 %1527
  %v1530 = vmul.f32 %v1513, %v1528
  %s1531 = scalar_lea.vmem %s0, 112
  %v1532 = vld [vmem:[%s1531] sm:$0xff]
  %1534 = vset.pattern.permute.xlu0 0
  %1535 = vperm.xlu0 %1534, %v1532
  %v1536 = vpop.permute.xlu0 %1535
  %v1538 = vmul.f32 %v1536, %v47
  %v1539 = vadd.f32 %v1538, %v54
  %1541 = vrot.lane.b32.xlu0 %v1530, 32
  %v1542 = vpop.permute.xlu0 %1541
  %v1543 = vsel %vm57, %v1542, 0
  %1545 = vmatprep.subr.mxu0 0.0
  %1546 = vmatpush1.msra.mxu0 %v24
  %1547 = vmatprep.subr.mxu0 0.0
  %1548 = vmatpush1.msra.mxu0 %v25
  %1549 = vmatprep.subr.mxu0 0.0
  %1550 = vmatpush1.msra.mxu0 %v26
  %1551 = vmatprep.subr.mxu0 0.0
  %1552 = vmatpush1.msra.mxu0 %v27
  %1553 = vmatprep.subr.mxu0 0.0
  %1554 = vmatpush1.msra.mxu0 0.0
  %1555 = vmatprep.subr.mxu0 0.0
  %1556 = vmatpush1.msra.mxu0 0.0
  %1557 = vmatprep.subr.mxu0 0.0
  %1558 = vmatpush1.msra.mxu0 0.0
  %1559 = vmatprep.subr.mxu0 0.0
  %1560 = vmatpush1.msra.mxu0 0.0
  %1561 = vmatprep.subr.mxu0 0.0
  %1562 = vmatpush1.msra.mxu0 0.0
  %1563 = vmatprep.subr.mxu0 0.0
  %1564 = vmatpush1.msra.mxu0 0.0
  %1565 = vmatprep.subr.mxu0 0.0
  %1566 = vmatpush1.msra.mxu0 0.0
  %1567 = vmatprep.subr.mxu0 0.0
  %1568 = vmatpush1.msra.mxu0 0.0
  %1569 = vmatprep.subr.mxu0 0.0
  %1570 = vmatpush1.msra.mxu0 0.0
  %1571 = vmatprep.subr.mxu0 0.0
  %1572 = vmatpush1.msra.mxu0 0.0
  %1573 = vmatprep.subr.mxu0 0.0
  %1574 = vmatpush1.msra.mxu0 0.0
  %1575 = vmatprep.subr.mxu0 0.0
  %1576 = vmatpush1.msra.mxu0 0.0
  %1577 = vmatprep.subr.mxu0 0.0
  %1578 = vmatpush1.msra.mxu0 0.0
  %1579 = vmatprep.subr.mxu0 0.0
  %1580 = vmatpush1.msra.mxu0 0.0
  %1581 = vmatprep.subr.mxu0 0.0
  %1582 = vmatpush1.msra.mxu0 0.0
  %1583 = vmatprep.subr.mxu0 0.0
  %1584 = vmatpush1.msra.mxu0 0.0
  %1585 = vmatprep.subr.mxu0 0.0
  %1586 = vmatpush1.msra.mxu0 0.0
  %1587 = vmatprep.subr.mxu0 0.0
  %1588 = vmatpush1.msra.mxu0 0.0
  %1589 = vmatprep.subr.mxu0 0.0
  %1590 = vmatpush1.msra.mxu0 0.0
  %1591 = vmatprep.subr.mxu0 0.0
  %1592 = vmatpush1.msra.mxu0 0.0
  %1593 = vmatprep.subr.mxu0 0.0
  %1594 = vmatpush1.msra.mxu0 0.0
  %1595 = vmatprep.subr.mxu0 0.0
  %1596 = vmatpush1.msra.mxu0 0.0
  %1597 = vmatprep.subr.mxu0 0.0
  %1598 = vmatpush1.msra.mxu0 0.0
  %1599 = vmatprep.subr.mxu0 0.0
  %1600 = vmatpush1.msra.mxu0 0.0
  %1601 = vmatprep.subr.mxu0 0.0
  %1602 = vmatpush1.msra.mxu0 0.0
  %1603 = vmatprep.subr.mxu0 0.0
  %1604 = vmatpush1.msra.mxu0 0.0
  %1605 = vmatprep.subr.mxu0 0.0
  %1606 = vmatpush1.msra.mxu0 0.0
  %1607 = vmatprep.subr.mxu0 0.0
  %1608 = vmatpush1.msra.mxu0 0.0
  %1609 = vmatprep.mubr.f32.mxu0 0.0
  %1610 = vmatmul.mubr.f32.gmra.mrb[0].mxu0 %v1543
  %v1611 = vpop.f32.mrb[0].mxu0
  %v1612 = vadd.f32 0.0, %v1611
  %v1613 = vpop.f32.mrb[0].mxu0
  %1614 = vdwg.mxu0
  %v1615 = vadd.f32 %v1539, %v1612
  %v1616 = vmul.f32 %v1615, %v35
  %v1617 = vtanh.pop %v1616
  %v1618 = vmul.f32 %v1617, %v35
  %v1619 = vadd.f32 %v1618, %v36
  %v1620 = vmul.f32 %v1619, %v1524
  %1622 = vrot.lane.b32.xlu0 %v1619, 64
  %v1623 = vpop.permute.xlu0 %1622
  %v1625 = vmul.f32 %v1619, %v1623
  %1627 = vrot.lane.b32.xlu0 %v1625, 32
  %v1628 = vpop.permute.xlu0 %1627
  %v1630 = vadd.f32 %v1620, %v1628
  %v1631 = vtanh.pop %v1630
  %1633 = vrot.lane.b32.xlu0 %v1631, 64
  %v1634 = vpop.permute.xlu0 %1633
  %v1636 = vmul.f32 %v1619, %v1634
  %s1637 = scalar_lea.vmem %s0, 120
  %v1638 = vld [vmem:[%s1637] sm:$0xff]
  %1640 = vset.pattern.permute.xlu0 0
  %1641 = vperm.xlu0 %1640, %v1638
  %v1642 = vpop.permute.xlu0 %1641
  %v1644 = vmul.f32 %v1642, %v47
  %v1645 = vadd.f32 %v1644, %v54
  %1647 = vrot.lane.b32.xlu0 %v1636, 32
  %v1648 = vpop.permute.xlu0 %1647
  %v1649 = vsel %vm57, %v1648, 0
  %1651 = vmatprep.subr.mxu0 0.0
  %1652 = vmatpush1.msra.mxu0 %v24
  %1653 = vmatprep.subr.mxu0 0.0
  %1654 = vmatpush1.msra.mxu0 %v25
  %1655 = vmatprep.subr.mxu0 0.0
  %1656 = vmatpush1.msra.mxu0 %v26
  %1657 = vmatprep.subr.mxu0 0.0
  %1658 = vmatpush1.msra.mxu0 %v27
  %1659 = vmatprep.subr.mxu0 0.0
  %1660 = vmatpush1.msra.mxu0 0.0
  %1661 = vmatprep.subr.mxu0 0.0
  %1662 = vmatpush1.msra.mxu0 0.0
  %1663 = vmatprep.subr.mxu0 0.0
  %1664 = vmatpush1.msra.mxu0 0.0
  %1665 = vmatprep.subr.mxu0 0.0
  %1666 = vmatpush1.msra.mxu0 0.0
  %1667 = vmatprep.subr.mxu0 0.0
  %1668 = vmatpush1.msra.mxu0 0.0
  %1669 = vmatprep.subr.mxu0 0.0
  %1670 = vmatpush1.msra.mxu0 0.0
  %1671 = vmatprep.subr.mxu0 0.0
  %1672 = vmatpush1.msra.mxu0 0.0
  %1673 = vmatprep.subr.mxu0 0.0
  %1674 = vmatpush1.msra.mxu0 0.0
  %1675 = vmatprep.subr.mxu0 0.0
  %1676 = vmatpush1.msra.mxu0 0.0
  %1677 = vmatprep.subr.mxu0 0.0
  %1678 = vmatpush1.msra.mxu0 0.0
  %1679 = vmatprep.subr.mxu0 0.0
  %1680 = vmatpush1.msra.mxu0 0.0
  %1681 = vmatprep.subr.mxu0 0.0
  %1682 = vmatpush1.msra.mxu0 0.0
  %1683 = vmatprep.subr.mxu0 0.0
  %1684 = vmatpush1.msra.mxu0 0.0
  %1685 = vmatprep.subr.mxu0 0.0
  %1686 = vmatpush1.msra.mxu0 0.0
  %1687 = vmatprep.subr.mxu0 0.0
  %1688 = vmatpush1.msra.mxu0 0.0
  %1689 = vmatprep.subr.mxu0 0.0
  %1690 = vmatpush1.msra.mxu0 0.0
  %1691 = vmatprep.subr.mxu0 0.0
  %1692 = vmatpush1.msra.mxu0 0.0
  %1693 = vmatprep.subr.mxu0 0.0
  %1694 = vmatpush1.msra.mxu0 0.0
  %1695 = vmatprep.subr.mxu0 0.0
  %1696 = vmatpush1.msra.mxu0 0.0
  %1697 = vmatprep.subr.mxu0 0.0
  %1698 = vmatpush1.msra.mxu0 0.0
  %1699 = vmatprep.subr.mxu0 0.0
  %1700 = vmatpush1.msra.mxu0 0.0
  %1701 = vmatprep.subr.mxu0 0.0
  %1702 = vmatpush1.msra.mxu0 0.0
  %1703 = vmatprep.subr.mxu0 0.0
  %1704 = vmatpush1.msra.mxu0 0.0
  %1705 = vmatprep.subr.mxu0 0.0
  %1706 = vmatpush1.msra.mxu0 0.0
  %1707 = vmatprep.subr.mxu0 0.0
  %1708 = vmatpush1.msra.mxu0 0.0
  %1709 = vmatprep.subr.mxu0 0.0
  %1710 = vmatpush1.msra.mxu0 0.0
  %1711 = vmatprep.subr.mxu0 0.0
  %1712 = vmatpush1.msra.mxu0 0.0
  %1713 = vmatprep.subr.mxu0 0.0
  %1714 = vmatpush1.msra.mxu0 0.0
  %1715 = vmatprep.mubr.f32.mxu0 0.0
  %1716 = vmatmul.mubr.f32.gmra.mrb[0].mxu0 %v1649
  %v1717 = vpop.f32.mrb[0].mxu0
  %v1718 = vadd.f32 0.0, %v1717
  %v1719 = vpop.f32.mrb[0].mxu0
  %1720 = vdwg.mxu0
  %v1721 = vadd.f32 %v1645, %v1718
  %v1722 = vmul.f32 %v1721, %v35
  %v1723 = vtanh.pop %v1722
  %v1724 = vmul.f32 %v1723, %v35
  %v1725 = vadd.f32 %v1724, %v36
  %v1726 = vmul.f32 %v1725, %v1630
  %1728 = vrot.lane.b32.xlu0 %v1725, 64
  %v1729 = vpop.permute.xlu0 %1728
  %v1731 = vmul.f32 %v1725, %v1729
  %1733 = vrot.lane.b32.xlu0 %v1731, 32
  %v1734 = vpop.permute.xlu0 %1733
  %v1736 = vadd.f32 %v1726, %v1734
  %v1737 = vtanh.pop %v1736
  %1739 = vrot.lane.b32.xlu0 %v1737, 64
  %v1740 = vpop.permute.xlu0 %1739
  %v1742 = vmul.f32 %v1725, %v1740
  %v1743 = vld [vmem:[%s4] sm:$0xff]
  %v1744 = vld [vmem:[%s4 + $0x8] sm:$0xff]
  %v1745 = vld [vmem:[%s4 + $0x10] sm:$0xff]
  %v1746 = vld [vmem:[%s4 + $0x18] sm:$0xff]
  %s1747 = sld [smem:[#allocation2]]
  %v1748 = vstv %s1747
  %1750 = vrot.lane.b32.xlu0 %v1742, 32
  %v1751 = vpop.permute.xlu0 %1750
  %v1752 = vsel %vm57, %v1751, 0
  %1754 = vmatprep.subr.mxu0 0.0
  %1755 = vmatpush1.msra.mxu0 %v1743
  %1756 = vmatprep.subr.mxu0 0.0
  %1757 = vmatpush1.msra.mxu0 %v1744
  %1758 = vmatprep.subr.mxu0 0.0
  %1759 = vmatpush1.msra.mxu0 %v1745
  %1760 = vmatprep.subr.mxu0 0.0
  %1761 = vmatpush1.msra.mxu0 %v1746
  %1762 = vmatprep.subr.mxu0 0.0
  %1763 = vmatpush1.msra.mxu0 0.0
  %1764 = vmatprep.subr.mxu0 0.0
  %1765 = vmatpush1.msra.mxu0 0.0
  %1766 = vmatprep.subr.mxu0 0.0
  %1767 = vmatpush1.msra.mxu0 0.0
  %1768 = vmatprep.subr.mxu0 0.0
  %1769 = vmatpush1.msra.mxu0 0.0
  %1770 = vmatprep.subr.mxu0 0.0
  %1771 = vmatpush1.msra.mxu0 0.0
  %1772 = vmatprep.subr.mxu0 0.0
  %1773 = vmatpush1.msra.mxu0 0.0
  %1774 = vmatprep.subr.mxu0 0.0
  %1775 = vmatpush1.msra.mxu0 0.0
  %1776 = vmatprep.subr.mxu0 0.0
  %1777 = vmatpush1.msra.mxu0 0.0
  %1778 = vmatprep.subr.mxu0 0.0
  %1779 = vmatpush1.msra.mxu0 0.0
  %1780 = vmatprep.subr.mxu0 0.0
  %1781 = vmatpush1.msra.mxu0 0.0
  %1782 = vmatprep.subr.mxu0 0.0
  %1783 = vmatpush1.msra.mxu0 0.0
  %1784 = vmatprep.subr.mxu0 0.0
  %1785 = vmatpush1.msra.mxu0 0.0
  %1786 = vmatprep.subr.mxu0 0.0
  %1787 = vmatpush1.msra.mxu0 0.0
  %1788 = vmatprep.subr.mxu0 0.0
  %1789 = vmatpush1.msra.mxu0 0.0
  %1790 = vmatprep.subr.mxu0 0.0
  %1791 = vmatpush1.msra.mxu0 0.0
  %1792 = vmatprep.subr.mxu0 0.0
  %1793 = vmatpush1.msra.mxu0 0.0
  %1794 = vmatprep.subr.mxu0 0.0
  %1795 = vmatpush1.msra.mxu0 0.0
  %1796 = vmatprep.subr.mxu0 0.0
  %1797 = vmatpush1.msra.mxu0 0.0
  %1798 = vmatprep.subr.mxu0 0.0
  %1799 = vmatpush1.msra.mxu0 0.0
  %1800 = vmatprep.subr.mxu0 0.0
  %1801 = vmatpush1.msra.mxu0 0.0
  %1802 = vmatprep.subr.mxu0 0.0
  %1803 = vmatpush1.msra.mxu0 0.0
  %1804 = vmatprep.subr.mxu0 0.0
  %1805 = vmatpush1.msra.mxu0 0.0
  %1806 = vmatprep.subr.mxu0 0.0
  %1807 = vmatpush1.msra.mxu0 0.0
  %1808 = vmatprep.subr.mxu0 0.0
  %1809 = vmatpush1.msra.mxu0 0.0
  %1810 = vmatprep.subr.mxu0 0.0
  %1811 = vmatpush1.msra.mxu0 0.0
  %1812 = vmatprep.subr.mxu0 0.0
  %1813 = vmatpush1.msra.mxu0 0.0
  %1814 = vmatprep.subr.mxu0 0.0
  %1815 = vmatpush1.msra.mxu0 0.0
  %1816 = vmatprep.subr.mxu0 0.0
  %1817 = vmatpush1.msra.mxu0 0.0
  %1818 = vmatprep.mubr.f32.mxu0 0.0
  %1819 = vmatmul.mubr.f32.gmra.mrb[0].mxu0 %v1752
  %v1820 = vpop.f32.mrb[0].mxu0
  %v1821 = vadd.f32 %v1748, %v1820
  %v1822 = vpop.f32.mrb[0].mxu0
  %1823 = vdwg.mxu0
  %vm1824 = vcmask 7168
  %1825 = vst.msk [vmem:[%s6] sm:$0xff] %vm1824, %v1821
  // Predicated region
  $region26: #{heart_rate_lstm.1} parent=0 // pred_check
    _
  $region27: #{heart_rate_lstm.1} parent=0 // pred_check_branch
    %1827 = sbr.rel (0) target = $region29
  $region28: #{heart_rate_lstm.1} parent=0 // pred_region
    _
  $region29: #{heart_rate_lstm.1} parent=0 // pred_fallthru
    _
  // Predicated region
  $region30: #{heart_rate_lstm.1} parent=0 // pred_check
    _
  $region31: #{heart_rate_lstm.1} parent=0 // pred_check_branch
    %1829 = sbr.rel (0) target = $region33
  $region32: #{heart_rate_lstm.1} parent=0 // pred_region
    _
  $region33: #{heart_rate_lstm.1} parent=0 // pred_fallthru
    _

</llo_original>
